<compile_context>
chip_gen: v7x
topology: tpu7x:2x2x1
jax: 0.10.0
libtpu: 0.0.40
codegen_flags: <defaults>
</compile_context>

<pallas_src>
import functools

import jax
import jax.numpy as jnp
from jax.experimental import pallas as pl
from jax.experimental.pallas import tpu as pltpu

LANE = 128  # padded per-gate / per-feature width (lane-aligned)


def _encoder_gru_kernel(idx_ref, emb_ref, wih_ref, whh_ref, bcomb_ref, bn_ref,
                        hN_ref, act_scr, gi_scr, *, seq_len):
    """One grid step == one GRU layer over the full sequence (batch = 1).

    idx_ref:   (S,)   SMEM  scalar-prefetched token indices
    emb_ref:   (V, P)       padded embedding table (read only at layer 0)
    wih_ref:   (1, P, 3P)   this layer's input weights  (gates [r|z|n], padded)
    whh_ref:   (1, P, 3P)   this layer's hidden weights
    bcomb_ref: (1, 1, 3P)   b_ih with b_hh folded in for the r/z gates
    bn_ref:    (1, 1, P)    b_hh of the n gate
    hN_ref:    (L, P)       final hidden state of every layer (resident block)
    act_scr:   (S, P)  VMEM per-step hidden states == next layer's input
    gi_scr:    (S, 3P) VMEM hoisted input projection for all timesteps
    """
    P = LANE
    layer = pl.program_id(0)

    # Layer 0: gather the embedded tokens directly from the VMEM-resident
    # (padded) table using the SMEM indices.  Later layers reuse act_scr,
    # which holds the previous layer's per-step hidden states.
    @pl.when(layer == 0)
    def _():
        for t in range(seq_len):
            act_scr[pl.ds(t, 1), :] = emb_ref[pl.ds(idx_ref[t], 1), :]

    # Hoisted input projection: one (S, P) @ (P, 3P) matmul per layer instead of
    # S matmuls with M=1 inside the serial recurrence.  r/z hidden biases are
    # pre-folded into bcomb, so those gates need no per-step bias add.
    gi_scr[...] = (
        jnp.dot(act_scr[...], wih_ref[0], preferred_element_type=jnp.float32)
        + bcomb_ref[0])

    w_hh = whh_ref[0]          # (P, 3P)
    b_hn = bn_ref[0]           # (1, P)

    # Fully unrolled time loop (S is a small static trip count); h is carried as
    # a value, never stored/reloaded through VMEM per step.  Gate slices land on
    # 128-lane boundaries (0, P, 2P).
    h = jnp.zeros((1, P), jnp.float32)
    for t in range(seq_len):
        gi = gi_scr[pl.ds(t, 1), :]                                # (1, 3P)
        gh = jnp.dot(h, w_hh, preferred_element_type=jnp.float32)  # (1, 3P)
        rz = jax.nn.sigmoid(gi[:, :2 * P] + gh[:, :2 * P])         # fused r,z
        r = rz[:, :P]
        z = rz[:, P:]
        n = jnp.tanh(gi[:, 2 * P:] + r * (gh[:, 2 * P:] + b_hn))
        h = n + z * (h - n)                       # == (1 - z) * n + z * h
        act_scr[pl.ds(t, 1), :] = h               # next layer's input, row t

    hN_ref[pl.ds(layer, 1), :] = h


def _fused_encoder_gru(indices, emb_p, wih_s, whh_s, bcomb_s, bn_s,
                       num_layers, seq_len):
    """Whole encoder (gather + stacked GRU) in one pallas_call -> (L, P)."""
    P = LANE
    L = num_layers
    V = emb_p.shape[0]
    kernel = functools.partial(_encoder_gru_kernel, seq_len=seq_len)
    return pl.pallas_call(
        kernel,
        out_shape=jax.ShapeDtypeStruct((L, P), jnp.float32),
        grid_spec=pltpu.PrefetchScalarGridSpec(
            num_scalar_prefetch=1,           # token indices -> SMEM
            grid=(L,),
            in_specs=[
                pl.BlockSpec((V, P), lambda l, idx: (0, 0)),
                pl.BlockSpec((1, P, 3 * P), lambda l, idx: (l, 0, 0)),
                pl.BlockSpec((1, P, 3 * P), lambda l, idx: (l, 0, 0)),
                pl.BlockSpec((1, 1, 3 * P), lambda l, idx: (l, 0, 0)),
                pl.BlockSpec((1, 1, P), lambda l, idx: (l, 0, 0)),
            ],
            # Output block == full array, constant index map: stays resident in
            # VMEM across layers, single HBM writeback at the end.
            out_specs=pl.BlockSpec((L, P), lambda l, idx: (0, 0)),
            scratch_shapes=[
                pltpu.VMEM((seq_len, P), jnp.float32),      # inter-layer acts
                pltpu.VMEM((seq_len, 3 * P), jnp.float32),  # hoisted input proj
            ]),
        compiler_params=pltpu.CompilerParams(
            dimension_semantics=("arbitrary",)),            # layers are serial
    )(indices, emb_p, wih_s, whh_s, bcomb_s, bn_s)


def pack_encoder_params(emb_table, gru_params, rnn_hidden_size):
    """Pad & stack the embedding table and per-layer GRU params (lane-aligned).

    Each gate gets its own 128-lane slab (actual weights in the first H lanes,
    zeros elsewhere); unused input rows/lanes are zero so padded activation
    lanes contribute nothing.  b_hh of the r/z gates is folded into the input
    bias.  This is one-time parameter prep (plain-JAX glue).
    """
    P = LANE
    H = rnn_hidden_size
    L = len(gru_params)
    V, E = emb_table.shape
    V_pad = ((V + 7) // 8) * 8
    emb_p = jnp.zeros((V_pad, P), jnp.float32).at[:V, :E].set(
        emb_table.astype(jnp.float32))

    wih_s = jnp.zeros((L, P, 3 * P), jnp.float32)
    whh_s = jnp.zeros((L, P, 3 * P), jnp.float32)
    bcomb_s = jnp.zeros((L, 1, 3 * P), jnp.float32)
    bn_s = jnp.zeros((L, 1, P), jnp.float32)
    for l, (w_ih_t, w_hh_t, b_ih, b_hh) in enumerate(gru_params):
        d_in = w_ih_t.shape[0]
        for g in range(3):
            wih_s = wih_s.at[l, :d_in, g * P:g * P + H].set(
                w_ih_t[:, g * H:(g + 1) * H])
            whh_s = whh_s.at[l, :H, g * P:g * P + H].set(
                w_hh_t[:, g * H:(g + 1) * H])
            bg = b_ih[0, g * H:(g + 1) * H]
            if g < 2:                      # fold b_hh into the r and z gates
                bg = bg + b_hh[0, g * H:(g + 1) * H]
            bcomb_s = bcomb_s.at[l, 0, g * P:g * P + H].set(bg)
        bn_s = bn_s.at[l, 0, :H].set(b_hh[0, 2 * H:3 * H])
    return emb_p, wih_s, whh_s, bcomb_s, bn_s


def encoder_rnn_edges_forward(indices, emb_table, gru_params, num_layers,
                              rnn_hidden_size):
    """Mirrors EncoderRNNEdges.forward with self.hidden == None (zero init).

    indices: (S,) int32 -> embedding lookup -> (1, S, hidden_size) -> GRU ->
    returns hidden.view(1, -1) == (1, num_layers * rnn_hidden_size).
    """
    H = rnn_hidden_size
    S = indices.shape[0]
    d_in0 = emb_table.shape[1]
    assert d_in0 <= LANE and H <= LANE, "features must fit in one 128-lane slab"

    emb_p, wih_s, whh_s, bcomb_s, bn_s = pack_encoder_params(
        emb_table, gru_params, rnn_hidden_size)
    hN = _fused_encoder_gru(indices.astype(jnp.int32), emb_p, wih_s, whh_s,
                            bcomb_s, bn_s, num_layers, S)       # (L, P)
    return hN[:, :H].reshape(1, num_layers * H)


def _gru_reference(indices, emb_table, gru_params, num_layers, rnn_hidden_size):
    """Pure-JAX reference of the same computation (PyTorch GRU semantics)."""
    x = jnp.take(emb_table, indices, axis=0).astype(jnp.float32)
    H = rnn_hidden_size
    h_finals = []
    layer_in = x
    for layer in range(num_layers):
        w_ih_t, w_hh_t, b_ih, b_hh = gru_params[layer]
        h = jnp.zeros((1, H), jnp.float32)
        ys = []
        for t in range(layer_in.shape[0]):
            x_t = layer_in[t:t + 1]
            gi = x_t @ w_ih_t + b_ih
            gh = h @ w_hh_t + b_hh
            r = jax.nn.sigmoid(gi[:, :H] + gh[:, :H])
            z = jax.nn.sigmoid(gi[:, H:2 * H] + gh[:, H:2 * H])
            n = jnp.tanh(gi[:, 2 * H:] + r * gh[:, 2 * H:])
            h = (1.0 - z) * n + z * h
            ys.append(h)
        layer_in = jnp.concatenate(ys, axis=0)
        h_finals.append(h)
    return jnp.stack(h_finals, axis=0).reshape(1, -1)


if __name__ == "__main__":
    # Small shapes consistent with the module's forward.
    num_embeddings = 50     # vocabulary of the external nn.Embedding
    hidden_size = 32        # embedding dim == GRU input size
    rnn_hidden_size = 32    # GRU hidden size
    num_layers = 2
    seq_len = 8

    key = jax.random.PRNGKey(0)
    k_emb, k_idx, k_w = jax.random.split(key, 3)

    # nn.Embedding weight init: uniform(-0.001, 0.001)  (from _init_weights)
    emb_table = jax.random.uniform(
        k_emb, (num_embeddings, hidden_size), jnp.float32,
        minval=-0.001, maxval=0.001)

    # Input token indices (the `embedding` argument of forward).
    indices = jax.random.randint(k_idx, (seq_len,), 0, num_embeddings, jnp.int32)

    # GRU parameters, PyTorch default init uniform(-1/sqrt(H), 1/sqrt(H)),
    # gate order [r | z | n]; stored pre-transposed (D_in, 3H) for the kernel.
    bound = 1.0 / (rnn_hidden_size ** 0.5)
    gru_params = []
    wkeys = jax.random.split(k_w, num_layers * 4)
    for layer in range(num_layers):
        d_in = hidden_size if layer == 0 else rnn_hidden_size
        k0, k1, k2, k3 = wkeys[4 * layer: 4 * layer + 4]
        w_ih = jax.random.uniform(k0, (3 * rnn_hidden_size, d_in), jnp.float32,
                                  minval=-bound, maxval=bound)
        w_hh = jax.random.uniform(k1, (3 * rnn_hidden_size, rnn_hidden_size),
                                  jnp.float32, minval=-bound, maxval=bound)
        b_ih = jax.random.uniform(k2, (1, 3 * rnn_hidden_size), jnp.float32,
                                  minval=-bound, maxval=bound)
        b_hh = jax.random.uniform(k3, (1, 3 * rnn_hidden_size), jnp.float32,
                                  minval=-bound, maxval=bound)
        gru_params.append((w_ih.T, w_hh.T, b_ih, b_hh))

    out = encoder_rnn_edges_forward(indices, emb_table, gru_params,
                                    num_layers, rnn_hidden_size)
    out = jax.block_until_ready(out)

    ref = _gru_reference(indices, emb_table, gru_params,
                         num_layers, rnn_hidden_size)
    assert out.shape == (1, num_layers * rnn_hidden_size), out.shape
    assert jnp.allclose(out, ref, atol=1e-5, rtol=1e-5), (
        f"max abs err = {jnp.max(jnp.abs(out - ref))}")

    print("KERNEL_OK")
</pallas_src>

<mosaic_0001>
module attributes {stable_mosaic.version = 11 : i64} {
  func.func @_encoder_gru_kernel(%arg0: i32, %arg1: memref<8xi32, #tpu.memory_space<smem>>, %arg2: memref<56x128xf32, #tpu.memory_space<vmem>>, %arg3: memref<1x128x384xf32, #tpu.memory_space<vmem>>, %arg4: memref<1x128x384xf32, #tpu.memory_space<vmem>>, %arg5: memref<1x1x384xf32, #tpu.memory_space<vmem>>, %arg6: memref<1x1x128xf32, #tpu.memory_space<vmem>>, %arg7: memref<2x128xf32, #tpu.memory_space<vmem>>, %arg8: memref<8x128xf32, #tpu.memory_space<vmem>>, %arg9: memref<8x384xf32, #tpu.memory_space<vmem>>) attributes {dimension_semantics = [#tpu.dimension_semantics<arbitrary>], iteration_bounds = array<i64: 2>, scalar_prefetch = 1 : i64, scratch_operands = 2 : i64, tpu.core_type = #tpu.core_type<tc>, window_params = [{pipeline_mode = #tpu.pipeline_mode<synchronous>, transform_indices = @transform_0, window_bounds = array<i64: 56, 128>}, {transform_indices = @transform_1, window_bounds = array<i64: 1, 128, 384>}, {transform_indices = @transform_2, window_bounds = array<i64: 1, 128, 384>}, {transform_indices = @transform_3, window_bounds = array<i64: 1, 1, 384>}, {transform_indices = @transform_4, window_bounds = array<i64: 1, 1, 128>}, {pipeline_mode = #tpu.pipeline_mode<synchronous>, transform_indices = @transform_5, window_bounds = array<i64: 2, 128>}]} {
    %c0_i32 = arith.constant 0 : i32
    %0 = arith.cmpi eq, %arg0, %c0_i32 : i32
    %1 = arith.extui %0 : i1 to i32
    %c0_i32_0 = arith.constant 0 : i32
    %2 = arith.cmpi ne, %1, %c0_i32_0 : i32
    scf.if %2 {
      %c0_59 = arith.constant 0 : index
      %195 = memref.load %arg1[%c0_59] : memref<8xi32, #tpu.memory_space<smem>>
      %196 = arith.index_cast %195 : i32 to index
      %c0_60 = arith.constant 0 : index
      %197 = vector.load %arg2[%196, %c0_60] : memref<56x128xf32, #tpu.memory_space<vmem>>, vector<1x128xf32>
      %c0_61 = arith.constant 0 : index
      %c0_62 = arith.constant 0 : index
      %198 = vector.load %arg8[%c0_61, %c0_62] : memref<8x128xf32, #tpu.memory_space<vmem>>, vector<1x128xf32>
      tpu.vector_store %arg8[%c0_61, %c0_62], %197 {strides = array<i32>} : memref<8x128xf32, #tpu.memory_space<vmem>>, vector<1x128xf32>,
      %c1_63 = arith.constant 1 : index
      %199 = memref.load %arg1[%c1_63] : memref<8xi32, #tpu.memory_space<smem>>
      %200 = arith.index_cast %199 : i32 to index
      %c0_64 = arith.constant 0 : index
      %201 = vector.load %arg2[%200, %c0_64] : memref<56x128xf32, #tpu.memory_space<vmem>>, vector<1x128xf32>
      %c1_65 = arith.constant 1 : index
      %c0_66 = arith.constant 0 : index
      %202 = vector.load %arg8[%c1_65, %c0_66] : memref<8x128xf32, #tpu.memory_space<vmem>>, vector<1x128xf32>
      tpu.vector_store %arg8[%c1_65, %c0_66], %201 {strides = array<i32>} : memref<8x128xf32, #tpu.memory_space<vmem>>, vector<1x128xf32>,
      %c2_67 = arith.constant 2 : index
      %203 = memref.load %arg1[%c2_67] : memref<8xi32, #tpu.memory_space<smem>>
      %204 = arith.index_cast %203 : i32 to index
      %c0_68 = arith.constant 0 : index
      %205 = vector.load %arg2[%204, %c0_68] : memref<56x128xf32, #tpu.memory_space<vmem>>, vector<1x128xf32>
      %c2_69 = arith.constant 2 : index
      %c0_70 = arith.constant 0 : index
      %206 = vector.load %arg8[%c2_69, %c0_70] : memref<8x128xf32, #tpu.memory_space<vmem>>, vector<1x128xf32>
      tpu.vector_store %arg8[%c2_69, %c0_70], %205 {strides = array<i32>} : memref<8x128xf32, #tpu.memory_space<vmem>>, vector<1x128xf32>,
      %c3_71 = arith.constant 3 : index
      %207 = memref.load %arg1[%c3_71] : memref<8xi32, #tpu.memory_space<smem>>
      %208 = arith.index_cast %207 : i32 to index
      %c0_72 = arith.constant 0 : index
      %209 = vector.load %arg2[%208, %c0_72] : memref<56x128xf32, #tpu.memory_space<vmem>>, vector<1x128xf32>
      %c3_73 = arith.constant 3 : index
      %c0_74 = arith.constant 0 : index
      %210 = vector.load %arg8[%c3_73, %c0_74] : memref<8x128xf32, #tpu.memory_space<vmem>>, vector<1x128xf32>
      tpu.vector_store %arg8[%c3_73, %c0_74], %209 {strides = array<i32>} : memref<8x128xf32, #tpu.memory_space<vmem>>, vector<1x128xf32>,
      %c4_75 = arith.constant 4 : index
      %211 = memref.load %arg1[%c4_75] : memref<8xi32, #tpu.memory_space<smem>>
      %212 = arith.index_cast %211 : i32 to index
      %c0_76 = arith.constant 0 : index
      %213 = vector.load %arg2[%212, %c0_76] : memref<56x128xf32, #tpu.memory_space<vmem>>, vector<1x128xf32>
      %c4_77 = arith.constant 4 : index
      %c0_78 = arith.constant 0 : index
      %214 = vector.load %arg8[%c4_77, %c0_78] : memref<8x128xf32, #tpu.memory_space<vmem>>, vector<1x128xf32>
      tpu.vector_store %arg8[%c4_77, %c0_78], %213 {strides = array<i32>} : memref<8x128xf32, #tpu.memory_space<vmem>>, vector<1x128xf32>,
      %c5_79 = arith.constant 5 : index
      %215 = memref.load %arg1[%c5_79] : memref<8xi32, #tpu.memory_space<smem>>
      %216 = arith.index_cast %215 : i32 to index
      %c0_80 = arith.constant 0 : index
      %217 = vector.load %arg2[%216, %c0_80] : memref<56x128xf32, #tpu.memory_space<vmem>>, vector<1x128xf32>
      %c5_81 = arith.constant 5 : index
      %c0_82 = arith.constant 0 : index
      %218 = vector.load %arg8[%c5_81, %c0_82] : memref<8x128xf32, #tpu.memory_space<vmem>>, vector<1x128xf32>
      tpu.vector_store %arg8[%c5_81, %c0_82], %217 {strides = array<i32>} : memref<8x128xf32, #tpu.memory_space<vmem>>, vector<1x128xf32>,
      %c6_83 = arith.constant 6 : index
      %219 = memref.load %arg1[%c6_83] : memref<8xi32, #tpu.memory_space<smem>>
      %220 = arith.index_cast %219 : i32 to index
      %c0_84 = arith.constant 0 : index
      %221 = vector.load %arg2[%220, %c0_84] : memref<56x128xf32, #tpu.memory_space<vmem>>, vector<1x128xf32>
      %c6_85 = arith.constant 6 : index
      %c0_86 = arith.constant 0 : index
      %222 = vector.load %arg8[%c6_85, %c0_86] : memref<8x128xf32, #tpu.memory_space<vmem>>, vector<1x128xf32>
      tpu.vector_store %arg8[%c6_85, %c0_86], %221 {strides = array<i32>} : memref<8x128xf32, #tpu.memory_space<vmem>>, vector<1x128xf32>,
      %c7_87 = arith.constant 7 : index
      %223 = memref.load %arg1[%c7_87] : memref<8xi32, #tpu.memory_space<smem>>
      %224 = arith.index_cast %223 : i32 to index
      %c0_88 = arith.constant 0 : index
      %225 = vector.load %arg2[%224, %c0_88] : memref<56x128xf32, #tpu.memory_space<vmem>>, vector<1x128xf32>
      %c7_89 = arith.constant 7 : index
      %c0_90 = arith.constant 0 : index
      %226 = vector.load %arg8[%c7_89, %c0_90] : memref<8x128xf32, #tpu.memory_space<vmem>>, vector<1x128xf32>
      tpu.vector_store %arg8[%c7_89, %c0_90], %225 {strides = array<i32>} : memref<8x128xf32, #tpu.memory_space<vmem>>, vector<1x128xf32>,
    } else {
    }
    %c0 = arith.constant 0 : index
    %c0_1 = arith.constant 0 : index
    %3 = vector.load %arg8[%c0, %c0_1] : memref<8x128xf32, #tpu.memory_space<vmem>>, vector<8x128xf32>
    %c0_2 = arith.constant 0 : index
    %c0_3 = arith.constant 0 : index
    %c0_4 = arith.constant 0 : index
    %4 = vector.load %arg3[%c0_2, %c0_3, %c0_4] : memref<1x128x384xf32, #tpu.memory_space<vmem>>, vector<1x128x384xf32>
    %5 = vector.shape_cast %4 : vector<1x128x384xf32> to vector<128x384xf32>
    %cst = arith.constant dense<0.000000e+00> : vector<8x384xf32>
    %6 = tpu.matmul %3, %5, %cst {dimension_numbers = #tpu.dot_dimension_numbers<[1], [0], [0], [1], [0, 0, 1, 1], [], []>} : vector<8x128xf32>, vector<128x384xf32>, vector<8x384xf32> -> vector<8x384xf32>
    %c0_5 = arith.constant 0 : index
    %c0_6 = arith.constant 0 : index
    %c0_7 = arith.constant 0 : index
    %7 = vector.load %arg5[%c0_5, %c0_6, %c0_7] : memref<1x1x384xf32, #tpu.memory_space<vmem>>, vector<1x1x384xf32>
    %8 = vector.shape_cast %7 : vector<1x1x384xf32> to vector<1x384xf32>
    %9 = vector.broadcast %8 : vector<1x384xf32> to vector<8x384xf32>
    %10 = arith.addf %6, %9 : vector<8x384xf32>
    %c0_8 = arith.constant 0 : index
    %c0_9 = arith.constant 0 : index
    %11 = vector.load %arg9[%c0_8, %c0_9] : memref<8x384xf32, #tpu.memory_space<vmem>>, vector<8x384xf32>
    tpu.vector_store %arg9[%c0_8, %c0_9], %10 {strides = array<i32>} : memref<8x384xf32, #tpu.memory_space<vmem>>, vector<8x384xf32>,
    %c0_10 = arith.constant 0 : index
    %c0_11 = arith.constant 0 : index
    %c0_12 = arith.constant 0 : index
    %12 = vector.load %arg4[%c0_10, %c0_11, %c0_12] : memref<1x128x384xf32, #tpu.memory_space<vmem>>, vector<1x128x384xf32>
    %13 = vector.shape_cast %12 : vector<1x128x384xf32> to vector<128x384xf32>
    %c0_13 = arith.constant 0 : index
    %c0_14 = arith.constant 0 : index
    %c0_15 = arith.constant 0 : index
    %14 = vector.load %arg6[%c0_13, %c0_14, %c0_15] : memref<1x1x128xf32, #tpu.memory_space<vmem>>, vector<1x1x128xf32>
    %15 = vector.shape_cast %14 : vector<1x1x128xf32> to vector<1x128xf32>
    %cst_16 = arith.constant 0.000000e+00 : f32
    %16 = vector.broadcast %cst_16 : f32 to vector<1x128xf32>
    %c0_17 = arith.constant 0 : index
    %c0_18 = arith.constant 0 : index
    %17 = vector.load %arg9[%c0_17, %c0_18] : memref<8x384xf32, #tpu.memory_space<vmem>>, vector<1x384xf32>
    %cst_19 = arith.constant dense<0.000000e+00> : vector<1x384xf32>
    %18 = tpu.matmul %16, %13, %cst_19 {dimension_numbers = #tpu.dot_dimension_numbers<[1], [0], [0], [1], [0, 0, 1, 1], [], []>} : vector<1x128xf32>, vector<128x384xf32>, vector<1x384xf32> -> vector<1x384xf32>
    %19 = vector.extract_strided_slice %17 {offsets = [0, 0], sizes = [1, 256], strides = [1, 1]} : vector<1x384xf32> to vector<1x256xf32>
    %20 = vector.extract_strided_slice %18 {offsets = [0, 0], sizes = [1, 256], strides = [1, 1]} : vector<1x384xf32> to vector<1x256xf32>
    %21 = arith.addf %19, %20 : vector<1x256xf32>
    %22 = arith.negf %21 : vector<1x256xf32>
    %23 = math.exp %22 : vector<1x256xf32>
    %cst_20 = arith.constant 1.000000e+00 : f32
    %24 = vector.broadcast %cst_20 : f32 to vector<1x256xf32>
    %25 = arith.addf %24, %23 : vector<1x256xf32>
    %26 = arith.divf %24, %25 : vector<1x256xf32>
    %27 = vector.extract_strided_slice %26 {offsets = [0, 0], sizes = [1, 128], strides = [1, 1]} : vector<1x256xf32> to vector<1x128xf32>
    %28 = vector.extract_strided_slice %26 {offsets = [0, 128], sizes = [1, 128], strides = [1, 1]} : vector<1x256xf32> to vector<1x128xf32>
    %29 = vector.extract_strided_slice %17 {offsets = [0, 256], sizes = [1, 128], strides = [1, 1]} : vector<1x384xf32> to vector<1x128xf32>
    %30 = vector.extract_strided_slice %18 {offsets = [0, 256], sizes = [1, 128], strides = [1, 1]} : vector<1x384xf32> to vector<1x128xf32>
    %31 = arith.addf %30, %15 : vector<1x128xf32>
    %32 = arith.mulf %27, %31 : vector<1x128xf32>
    %33 = arith.addf %29, %32 : vector<1x128xf32>
    %34 = math.tanh %33 : vector<1x128xf32>
    %35 = arith.subf %16, %34 : vector<1x128xf32>
    %36 = arith.mulf %28, %35 : vector<1x128xf32>
    %37 = arith.addf %34, %36 : vector<1x128xf32>
    %c0_21 = arith.constant 0 : index
    %c0_22 = arith.constant 0 : index
    %38 = vector.load %arg8[%c0_21, %c0_22] : memref<8x128xf32, #tpu.memory_space<vmem>>, vector<1x128xf32>
    tpu.vector_store %arg8[%c0_21, %c0_22], %37 {strides = array<i32>} : memref<8x128xf32, #tpu.memory_space<vmem>>, vector<1x128xf32>,
    %c1 = arith.constant 1 : index
    %c0_23 = arith.constant 0 : index
    %39 = vector.load %arg9[%c1, %c0_23] : memref<8x384xf32, #tpu.memory_space<vmem>>, vector<1x384xf32>
    %cst_24 = arith.constant dense<0.000000e+00> : vector<1x384xf32>
    %40 = tpu.matmul %37, %13, %cst_24 {dimension_numbers = #tpu.dot_dimension_numbers<[1], [0], [0], [1], [0, 0, 1, 1], [], []>} : vector<1x128xf32>, vector<128x384xf32>, vector<1x384xf32> -> vector<1x384xf32>
    %41 = vector.extract_strided_slice %39 {offsets = [0, 0], sizes = [1, 256], strides = [1, 1]} : vector<1x384xf32> to vector<1x256xf32>
    %42 = vector.extract_strided_slice %40 {offsets = [0, 0], sizes = [1, 256], strides = [1, 1]} : vector<1x384xf32> to vector<1x256xf32>
    %43 = arith.addf %41, %42 : vector<1x256xf32>
    %44 = arith.negf %43 : vector<1x256xf32>
    %45 = math.exp %44 : vector<1x256xf32>
    %cst_25 = arith.constant 1.000000e+00 : f32
    %46 = vector.broadcast %cst_25 : f32 to vector<1x256xf32>
    %47 = arith.addf %46, %45 : vector<1x256xf32>
    %48 = arith.divf %46, %47 : vector<1x256xf32>
    %49 = vector.extract_strided_slice %48 {offsets = [0, 0], sizes = [1, 128], strides = [1, 1]} : vector<1x256xf32> to vector<1x128xf32>
    %50 = vector.extract_strided_slice %48 {offsets = [0, 128], sizes = [1, 128], strides = [1, 1]} : vector<1x256xf32> to vector<1x128xf32>
    %51 = vector.extract_strided_slice %39 {offsets = [0, 256], sizes = [1, 128], strides = [1, 1]} : vector<1x384xf32> to vector<1x128xf32>
    %52 = vector.extract_strided_slice %40 {offsets = [0, 256], sizes = [1, 128], strides = [1, 1]} : vector<1x384xf32> to vector<1x128xf32>
    %53 = arith.addf %52, %15 : vector<1x128xf32>
    %54 = arith.mulf %49, %53 : vector<1x128xf32>
    %55 = arith.addf %51, %54 : vector<1x128xf32>
    %56 = math.tanh %55 : vector<1x128xf32>
    %57 = arith.subf %37, %56 : vector<1x128xf32>
    %58 = arith.mulf %50, %57 : vector<1x128xf32>
    %59 = arith.addf %56, %58 : vector<1x128xf32>
    %c1_26 = arith.constant 1 : index
    %c0_27 = arith.constant 0 : index
    %60 = vector.load %arg8[%c1_26, %c0_27] : memref<8x128xf32, #tpu.memory_space<vmem>>, vector<1x128xf32>
    tpu.vector_store %arg8[%c1_26, %c0_27], %59 {strides = array<i32>} : memref<8x128xf32, #tpu.memory_space<vmem>>, vector<1x128xf32>,
    %c2 = arith.constant 2 : index
    %c0_28 = arith.constant 0 : index
    %61 = vector.load %arg9[%c2, %c0_28] : memref<8x384xf32, #tpu.memory_space<vmem>>, vector<1x384xf32>
    %cst_29 = arith.constant dense<0.000000e+00> : vector<1x384xf32>
    %62 = tpu.matmul %59, %13, %cst_29 {dimension_numbers = #tpu.dot_dimension_numbers<[1], [0], [0], [1], [0, 0, 1, 1], [], []>} : vector<1x128xf32>, vector<128x384xf32>, vector<1x384xf32> -> vector<1x384xf32>
    %63 = vector.extract_strided_slice %61 {offsets = [0, 0], sizes = [1, 256], strides = [1, 1]} : vector<1x384xf32> to vector<1x256xf32>
    %64 = vector.extract_strided_slice %62 {offsets = [0, 0], sizes = [1, 256], strides = [1, 1]} : vector<1x384xf32> to vector<1x256xf32>
    %65 = arith.addf %63, %64 : vector<1x256xf32>
    %66 = arith.negf %65 : vector<1x256xf32>
    %67 = math.exp %66 : vector<1x256xf32>
    %cst_30 = arith.constant 1.000000e+00 : f32
    %68 = vector.broadcast %cst_30 : f32 to vector<1x256xf32>
    %69 = arith.addf %68, %67 : vector<1x256xf32>
    %70 = arith.divf %68, %69 : vector<1x256xf32>
    %71 = vector.extract_strided_slice %70 {offsets = [0, 0], sizes = [1, 128], strides = [1, 1]} : vector<1x256xf32> to vector<1x128xf32>
    %72 = vector.extract_strided_slice %70 {offsets = [0, 128], sizes = [1, 128], strides = [1, 1]} : vector<1x256xf32> to vector<1x128xf32>
    %73 = vector.extract_strided_slice %61 {offsets = [0, 256], sizes = [1, 128], strides = [1, 1]} : vector<1x384xf32> to vector<1x128xf32>
    %74 = vector.extract_strided_slice %62 {offsets = [0, 256], sizes = [1, 128], strides = [1, 1]} : vector<1x384xf32> to vector<1x128xf32>
    %75 = arith.addf %74, %15 : vector<1x128xf32>
    %76 = arith.mulf %71, %75 : vector<1x128xf32>
    %77 = arith.addf %73, %76 : vector<1x128xf32>
    %78 = math.tanh %77 : vector<1x128xf32>
    %79 = arith.subf %59, %78 : vector<1x128xf32>
    %80 = arith.mulf %72, %79 : vector<1x128xf32>
    %81 = arith.addf %78, %80 : vector<1x128xf32>
    %c2_31 = arith.constant 2 : index
    %c0_32 = arith.constant 0 : index
    %82 = vector.load %arg8[%c2_31, %c0_32] : memref<8x128xf32, #tpu.memory_space<vmem>>, vector<1x128xf32>
    tpu.vector_store %arg8[%c2_31, %c0_32], %81 {strides = array<i32>} : memref<8x128xf32, #tpu.memory_space<vmem>>, vector<1x128xf32>,
    %c3 = arith.constant 3 : index
    %c0_33 = arith.constant 0 : index
    %83 = vector.load %arg9[%c3, %c0_33] : memref<8x384xf32, #tpu.memory_space<vmem>>, vector<1x384xf32>
    %cst_34 = arith.constant dense<0.000000e+00> : vector<1x384xf32>
    %84 = tpu.matmul %81, %13, %cst_34 {dimension_numbers = #tpu.dot_dimension_numbers<[1], [0], [0], [1], [0, 0, 1, 1], [], []>} : vector<1x128xf32>, vector<128x384xf32>, vector<1x384xf32> -> vector<1x384xf32>
    %85 = vector.extract_strided_slice %83 {offsets = [0, 0], sizes = [1, 256], strides = [1, 1]} : vector<1x384xf32> to vector<1x256xf32>
    %86 = vector.extract_strided_slice %84 {offsets = [0, 0], sizes = [1, 256], strides = [1, 1]} : vector<1x384xf32> to vector<1x256xf32>
    %87 = arith.addf %85, %86 : vector<1x256xf32>
    %88 = arith.negf %87 : vector<1x256xf32>
    %89 = math.exp %88 : vector<1x256xf32>
    %cst_35 = arith.constant 1.000000e+00 : f32
    %90 = vector.broadcast %cst_35 : f32 to vector<1x256xf32>
    %91 = arith.addf %90, %89 : vector<1x256xf32>
    %92 = arith.divf %90, %91 : vector<1x256xf32>
    %93 = vector.extract_strided_slice %92 {offsets = [0, 0], sizes = [1, 128], strides = [1, 1]} : vector<1x256xf32> to vector<1x128xf32>
    %94 = vector.extract_strided_slice %92 {offsets = [0, 128], sizes = [1, 128], strides = [1, 1]} : vector<1x256xf32> to vector<1x128xf32>
    %95 = vector.extract_strided_slice %83 {offsets = [0, 256], sizes = [1, 128], strides = [1, 1]} : vector<1x384xf32> to vector<1x128xf32>
    %96 = vector.extract_strided_slice %84 {offsets = [0, 256], sizes = [1, 128], strides = [1, 1]} : vector<1x384xf32> to vector<1x128xf32>
    %97 = arith.addf %96, %15 : vector<1x128xf32>
    %98 = arith.mulf %93, %97 : vector<1x128xf32>
    %99 = arith.addf %95, %98 : vector<1x128xf32>
    %100 = math.tanh %99 : vector<1x128xf32>
    %101 = arith.subf %81, %100 : vector<1x128xf32>
    %102 = arith.mulf %94, %101 : vector<1x128xf32>
    %103 = arith.addf %100, %102 : vector<1x128xf32>
    %c3_36 = arith.constant 3 : index
    %c0_37 = arith.constant 0 : index
    %104 = vector.load %arg8[%c3_36, %c0_37] : memref<8x128xf32, #tpu.memory_space<vmem>>, vector<1x128xf32>
    tpu.vector_store %arg8[%c3_36, %c0_37], %103 {strides = array<i32>} : memref<8x128xf32, #tpu.memory_space<vmem>>, vector<1x128xf32>,
    %c4 = arith.constant 4 : index
    %c0_38 = arith.constant 0 : index
    %105 = vector.load %arg9[%c4, %c0_38] : memref<8x384xf32, #tpu.memory_space<vmem>>, vector<1x384xf32>
    %cst_39 = arith.constant dense<0.000000e+00> : vector<1x384xf32>
    %106 = tpu.matmul %103, %13, %cst_39 {dimension_numbers = #tpu.dot_dimension_numbers<[1], [0], [0], [1], [0, 0, 1, 1], [], []>} : vector<1x128xf32>, vector<128x384xf32>, vector<1x384xf32> -> vector<1x384xf32>
    %107 = vector.extract_strided_slice %105 {offsets = [0, 0], sizes = [1, 256], strides = [1, 1]} : vector<1x384xf32> to vector<1x256xf32>
    %108 = vector.extract_strided_slice %106 {offsets = [0, 0], sizes = [1, 256], strides = [1, 1]} : vector<1x384xf32> to vector<1x256xf32>
    %109 = arith.addf %107, %108 : vector<1x256xf32>
    %110 = arith.negf %109 : vector<1x256xf32>
    %111 = math.exp %110 : vector<1x256xf32>
    %cst_40 = arith.constant 1.000000e+00 : f32
    %112 = vector.broadcast %cst_40 : f32 to vector<1x256xf32>
    %113 = arith.addf %112, %111 : vector<1x256xf32>
    %114 = arith.divf %112, %113 : vector<1x256xf32>
    %115 = vector.extract_strided_slice %114 {offsets = [0, 0], sizes = [1, 128], strides = [1, 1]} : vector<1x256xf32> to vector<1x128xf32>
    %116 = vector.extract_strided_slice %114 {offsets = [0, 128], sizes = [1, 128], strides = [1, 1]} : vector<1x256xf32> to vector<1x128xf32>
    %117 = vector.extract_strided_slice %105 {offsets = [0, 256], sizes = [1, 128], strides = [1, 1]} : vector<1x384xf32> to vector<1x128xf32>
    %118 = vector.extract_strided_slice %106 {offsets = [0, 256], sizes = [1, 128], strides = [1, 1]} : vector<1x384xf32> to vector<1x128xf32>
    %119 = arith.addf %118, %15 : vector<1x128xf32>
    %120 = arith.mulf %115, %119 : vector<1x128xf32>
    %121 = arith.addf %117, %120 : vector<1x128xf32>
    %122 = math.tanh %121 : vector<1x128xf32>
    %123 = arith.subf %103, %122 : vector<1x128xf32>
    %124 = arith.mulf %116, %123 : vector<1x128xf32>
    %125 = arith.addf %122, %124 : vector<1x128xf32>
    %c4_41 = arith.constant 4 : index
    %c0_42 = arith.constant 0 : index
    %126 = vector.load %arg8[%c4_41, %c0_42] : memref<8x128xf32, #tpu.memory_space<vmem>>, vector<1x128xf32>
    tpu.vector_store %arg8[%c4_41, %c0_42], %125 {strides = array<i32>} : memref<8x128xf32, #tpu.memory_space<vmem>>, vector<1x128xf32>,
    %c5 = arith.constant 5 : index
    %c0_43 = arith.constant 0 : index
    %127 = vector.load %arg9[%c5, %c0_43] : memref<8x384xf32, #tpu.memory_space<vmem>>, vector<1x384xf32>
    %cst_44 = arith.constant dense<0.000000e+00> : vector<1x384xf32>
    %128 = tpu.matmul %125, %13, %cst_44 {dimension_numbers = #tpu.dot_dimension_numbers<[1], [0], [0], [1], [0, 0, 1, 1], [], []>} : vector<1x128xf32>, vector<128x384xf32>, vector<1x384xf32> -> vector<1x384xf32>
    %129 = vector.extract_strided_slice %127 {offsets = [0, 0], sizes = [1, 256], strides = [1, 1]} : vector<1x384xf32> to vector<1x256xf32>
    %130 = vector.extract_strided_slice %128 {offsets = [0, 0], sizes = [1, 256], strides = [1, 1]} : vector<1x384xf32> to vector<1x256xf32>
    %131 = arith.addf %129, %130 : vector<1x256xf32>
    %132 = arith.negf %131 : vector<1x256xf32>
    %133 = math.exp %132 : vector<1x256xf32>
    %cst_45 = arith.constant 1.000000e+00 : f32
    %134 = vector.broadcast %cst_45 : f32 to vector<1x256xf32>
    %135 = arith.addf %134, %133 : vector<1x256xf32>
    %136 = arith.divf %134, %135 : vector<1x256xf32>
    %137 = vector.extract_strided_slice %136 {offsets = [0, 0], sizes = [1, 128], strides = [1, 1]} : vector<1x256xf32> to vector<1x128xf32>
    %138 = vector.extract_strided_slice %136 {offsets = [0, 128], sizes = [1, 128], strides = [1, 1]} : vector<1x256xf32> to vector<1x128xf32>
    %139 = vector.extract_strided_slice %127 {offsets = [0, 256], sizes = [1, 128], strides = [1, 1]} : vector<1x384xf32> to vector<1x128xf32>
    %140 = vector.extract_strided_slice %128 {offsets = [0, 256], sizes = [1, 128], strides = [1, 1]} : vector<1x384xf32> to vector<1x128xf32>
    %141 = arith.addf %140, %15 : vector<1x128xf32>
    %142 = arith.mulf %137, %141 : vector<1x128xf32>
    %143 = arith.addf %139, %142 : vector<1x128xf32>
    %144 = math.tanh %143 : vector<1x128xf32>
    %145 = arith.subf %125, %144 : vector<1x128xf32>
    %146 = arith.mulf %138, %145 : vector<1x128xf32>
    %147 = arith.addf %144, %146 : vector<1x128xf32>
    %c5_46 = arith.constant 5 : index
    %c0_47 = arith.constant 0 : index
    %148 = vector.load %arg8[%c5_46, %c0_47] : memref<8x128xf32, #tpu.memory_space<vmem>>, vector<1x128xf32>
    tpu.vector_store %arg8[%c5_46, %c0_47], %147 {strides = array<i32>} : memref<8x128xf32, #tpu.memory_space<vmem>>, vector<1x128xf32>,
    %c6 = arith.constant 6 : index
    %c0_48 = arith.constant 0 : index
    %149 = vector.load %arg9[%c6, %c0_48] : memref<8x384xf32, #tpu.memory_space<vmem>>, vector<1x384xf32>
    %cst_49 = arith.constant dense<0.000000e+00> : vector<1x384xf32>
    %150 = tpu.matmul %147, %13, %cst_49 {dimension_numbers = #tpu.dot_dimension_numbers<[1], [0], [0], [1], [0, 0, 1, 1], [], []>} : vector<1x128xf32>, vector<128x384xf32>, vector<1x384xf32> -> vector<1x384xf32>
    %151 = vector.extract_strided_slice %149 {offsets = [0, 0], sizes = [1, 256], strides = [1, 1]} : vector<1x384xf32> to vector<1x256xf32>
    %152 = vector.extract_strided_slice %150 {offsets = [0, 0], sizes = [1, 256], strides = [1, 1]} : vector<1x384xf32> to vector<1x256xf32>
    %153 = arith.addf %151, %152 : vector<1x256xf32>
    %154 = arith.negf %153 : vector<1x256xf32>
    %155 = math.exp %154 : vector<1x256xf32>
    %cst_50 = arith.constant 1.000000e+00 : f32
    %156 = vector.broadcast %cst_50 : f32 to vector<1x256xf32>
    %157 = arith.addf %156, %155 : vector<1x256xf32>
    %158 = arith.divf %156, %157 : vector<1x256xf32>
    %159 = vector.extract_strided_slice %158 {offsets = [0, 0], sizes = [1, 128], strides = [1, 1]} : vector<1x256xf32> to vector<1x128xf32>
    %160 = vector.extract_strided_slice %158 {offsets = [0, 128], sizes = [1, 128], strides = [1, 1]} : vector<1x256xf32> to vector<1x128xf32>
    %161 = vector.extract_strided_slice %149 {offsets = [0, 256], sizes = [1, 128], strides = [1, 1]} : vector<1x384xf32> to vector<1x128xf32>
    %162 = vector.extract_strided_slice %150 {offsets = [0, 256], sizes = [1, 128], strides = [1, 1]} : vector<1x384xf32> to vector<1x128xf32>
    %163 = arith.addf %162, %15 : vector<1x128xf32>
    %164 = arith.mulf %159, %163 : vector<1x128xf32>
    %165 = arith.addf %161, %164 : vector<1x128xf32>
    %166 = math.tanh %165 : vector<1x128xf32>
    %167 = arith.subf %147, %166 : vector<1x128xf32>
    %168 = arith.mulf %160, %167 : vector<1x128xf32>
    %169 = arith.addf %166, %168 : vector<1x128xf32>
    %c6_51 = arith.constant 6 : index
    %c0_52 = arith.constant 0 : index
    %170 = vector.load %arg8[%c6_51, %c0_52] : memref<8x128xf32, #tpu.memory_space<vmem>>, vector<1x128xf32>
    tpu.vector_store %arg8[%c6_51, %c0_52], %169 {strides = array<i32>} : memref<8x128xf32, #tpu.memory_space<vmem>>, vector<1x128xf32>,
    %c7 = arith.constant 7 : index
    %c0_53 = arith.constant 0 : index
    %171 = vector.load %arg9[%c7, %c0_53] : memref<8x384xf32, #tpu.memory_space<vmem>>, vector<1x384xf32>
    %cst_54 = arith.constant dense<0.000000e+00> : vector<1x384xf32>
    %172 = tpu.matmul %169, %13, %cst_54 {dimension_numbers = #tpu.dot_dimension_numbers<[1], [0], [0], [1], [0, 0, 1, 1], [], []>} : vector<1x128xf32>, vector<128x384xf32>, vector<1x384xf32> -> vector<1x384xf32>
    %173 = vector.extract_strided_slice %171 {offsets = [0, 0], sizes = [1, 256], strides = [1, 1]} : vector<1x384xf32> to vector<1x256xf32>
    %174 = vector.extract_strided_slice %172 {offsets = [0, 0], sizes = [1, 256], strides = [1, 1]} : vector<1x384xf32> to vector<1x256xf32>
    %175 = arith.addf %173, %174 : vector<1x256xf32>
    %176 = arith.negf %175 : vector<1x256xf32>
    %177 = math.exp %176 : vector<1x256xf32>
    %cst_55 = arith.constant 1.000000e+00 : f32
    %178 = vector.broadcast %cst_55 : f32 to vector<1x256xf32>
    %179 = arith.addf %178, %177 : vector<1x256xf32>
    %180 = arith.divf %178, %179 : vector<1x256xf32>
    %181 = vector.extract_strided_slice %180 {offsets = [0, 0], sizes = [1, 128], strides = [1, 1]} : vector<1x256xf32> to vector<1x128xf32>
    %182 = vector.extract_strided_slice %180 {offsets = [0, 128], sizes = [1, 128], strides = [1, 1]} : vector<1x256xf32> to vector<1x128xf32>
    %183 = vector.extract_strided_slice %171 {offsets = [0, 256], sizes = [1, 128], strides = [1, 1]} : vector<1x384xf32> to vector<1x128xf32>
    %184 = vector.extract_strided_slice %172 {offsets = [0, 256], sizes = [1, 128], strides = [1, 1]} : vector<1x384xf32> to vector<1x128xf32>
    %185 = arith.addf %184, %15 : vector<1x128xf32>
    %186 = arith.mulf %181, %185 : vector<1x128xf32>
    %187 = arith.addf %183, %186 : vector<1x128xf32>
    %188 = math.tanh %187 : vector<1x128xf32>
    %189 = arith.subf %169, %188 : vector<1x128xf32>
    %190 = arith.mulf %182, %189 : vector<1x128xf32>
    %191 = arith.addf %188, %190 : vector<1x128xf32>
    %c7_56 = arith.constant 7 : index
    %c0_57 = arith.constant 0 : index
    %192 = vector.load %arg8[%c7_56, %c0_57] : memref<8x128xf32, #tpu.memory_space<vmem>>, vector<1x128xf32>
    tpu.vector_store %arg8[%c7_56, %c0_57], %191 {strides = array<i32>} : memref<8x128xf32, #tpu.memory_space<vmem>>, vector<1x128xf32>,
    %193 = arith.index_cast %arg0 : i32 to index
    %c0_58 = arith.constant 0 : index
    %194 = vector.load %arg7[%193, %c0_58] : memref<2x128xf32, #tpu.memory_space<vmem>>, vector<1x128xf32>
    tpu.vector_store %arg7[%193, %c0_58], %191 {strides = array<i32>} : memref<2x128xf32, #tpu.memory_space<vmem>>, vector<1x128xf32>,
    return
  }
  func.func @transform_0(%arg0: i32, %arg1: memref<8xi32, #tpu.memory_space<smem>>) -> (i32, i32) {
    %c0_i32 = arith.constant 0 : i32
    %c0_i32_0 = arith.constant 0 : i32
    %c0_i32_1 = arith.constant 0 : i32
    return %c0_i32, %c0_i32_0 : i32, i32
  }
  func.func @transform_1(%arg0: i32, %arg1: memref<8xi32, #tpu.memory_space<smem>>) -> (i32, i32, i32) {
    %c0_i32 = arith.constant 0 : i32
    %c0_i32_0 = arith.constant 0 : i32
    %c0_i32_1 = arith.constant 0 : i32
    return %arg0, %c0_i32, %c0_i32_0 : i32, i32, i32
  }
  func.func @transform_2(%arg0: i32, %arg1: memref<8xi32, #tpu.memory_space<smem>>) -> (i32, i32, i32) {
    %c0_i32 = arith.constant 0 : i32
    %c0_i32_0 = arith.constant 0 : i32
    %c0_i32_1 = arith.constant 0 : i32
    return %arg0, %c0_i32, %c0_i32_0 : i32, i32, i32
  }
  func.func @transform_3(%arg0: i32, %arg1: memref<8xi32, #tpu.memory_space<smem>>) -> (i32, i32, i32) {
    %c0_i32 = arith.constant 0 : i32
    %c0_i32_0 = arith.constant 0 : i32
    %c0_i32_1 = arith.constant 0 : i32
    return %arg0, %c0_i32, %c0_i32_0 : i32, i32, i32
  }
  func.func @transform_4(%arg0: i32, %arg1: memref<8xi32, #tpu.memory_space<smem>>) -> (i32, i32, i32) {
    %c0_i32 = arith.constant 0 : i32
    %c0_i32_0 = arith.constant 0 : i32
    %c0_i32_1 = arith.constant 0 : i32
    return %arg0, %c0_i32, %c0_i32_0 : i32, i32, i32
  }
  func.func @transform_5(%arg0: i32, %arg1: memref<8xi32, #tpu.memory_space<smem>>) -> (i32, i32) {
    %c0_i32 = arith.constant 0 : i32
    %c0_i32_0 = arith.constant 0 : i32
    %c0_i32_1 = arith.constant 0 : i32
    return %c0_i32, %c0_i32_0 : i32, i32
  }
}

</mosaic_0001>

<llo_original>
// kernel: tpu_custom_call.1
$region0: #{tpu_custom_call.1}
  #allocation0 [shape = 'u32[]', space=smem, size = 0x4, offset = 0x4, fixed_abs, tag = 'smem constant byte address 0x4 - core index']
  #allocation1 [shape = 'u32[144,128]{1,0:T(1,128)}', space=vmem, size = 0x12000, scoped, tag = 'internal scratch']
  #allocation2 [shape = 'f32[8,128]{1,0:T(8,128)}', space=vmem, size = 0x1000, scoped, tag = 'scratch operand']
  #allocation3 [shape = 'f32[8,384]{1,0:T(8,128)}', space=vmem, size = 0x3000, scoped, tag = 'scratch operand']
  #allocation4 [shape = 's32[1]{0}', space=sflag, size = 0x4, scoped, tag = 'scoped memory for tpu_custom_call.1']
  #allocation5 [shape = 'u8[512]{0}', space=smem, size = 0x200, scoped, tag = 'prefetched SMEM operand 0']
  %s0 = inlined_call_operand.hbm [shape: s32[8], index: 0, kind: input, shape index: {}]
  %s1 = inlined_call_operand.hbm [shape: f32[56,128], index: 1, kind: input, shape index: {}]
  %s2 = inlined_call_operand.hbm [shape: f32[2,128,384], index: 2, kind: input, shape index: {}]
  %s3 = inlined_call_operand.hbm [shape: f32[2,128,384], index: 3, kind: input, shape index: {}]
  %s4 = inlined_call_operand.vmem [shape: f32[2,1,384], index: 4, kind: input, shape index: {}]
  %s5 = inlined_call_operand.vmem [shape: f32[2,1,128], index: 5, kind: input, shape index: {}]
  %s6 = inlined_call_operand.hbm [shape: f32[2,128], index: 6, kind: output, shape index: {}]
  %s7 = sld [smem:[#allocation0]]
  $region69: #{tpu_custom_call.1} parent=0
    _
  %s9 = ssub.s32 1, %s7
  %s10 = scalar_select 0, %s9, %s7
  %12 = dma.hbm_to_smem %s0, 16, [#allocation5], [#allocation4]
  %13 = dma.done [#allocation4], 16
  %14 = sfence
  $region1: #{tpu_custom_call.1} parent=0
    #allocation6 [shape = 'u8[28672]{0}', space=vmem, size = 0x7000, scoped, tag = 'input window, operand 1, single buffered']
    #allocation7 [shape = 's32[2]{0}', space=sflag, size = 0x8, scoped, tag = 'scoped memory for tpu_custom_call.1']
    #allocation8 [shape = 's32[2]{0}', space=sflag, size = 0x8, scoped, tag = 'scoped memory for tpu_custom_call.1']
    #allocation9 [shape = 'u8[393216]{0}', space=vmem, size = 0x60000, scoped, tag = 'input window, operand 2']
    #allocation10 [shape = 's32[2]{0}', space=sflag, size = 0x8, scoped, tag = 'scoped memory for tpu_custom_call.1']
    #allocation11 [shape = 'u8[393216]{0}', space=vmem, size = 0x60000, scoped, tag = 'input window, operand 3']
    #allocation12 [shape = 'u8[1024]{0}', space=vmem, size = 0x400, scoped, tag = 'output window, operand 0, single buffered']
    %15 = vsyncpa [#allocation7], 0
    %16 = vsyncpa [#allocation10], 0
    %s17 = scalar_lea.sflag [#allocation10], 1
    %18 = vsyncpa %s17, 0
    %19 = vsyncpa [#allocation8], 0
    loop: start=0, step=1, limit=4
    $region2: #{tpu_custom_call.1} parent=1 // loop_pre_header
      _
    $region3: #{tpu_custom_call.1} parent=1 // loop_header
      %s21 = sphi 0, %s25
      %p22 = scmp.ge.s32.totalorder %s21, 4
      %s29 = sphi 0, %s29
      %s31 = sphi 0, %s29
      %s32 = sphi 0, %s31
      %s46 = sphi 0, %s32
      %s52 = sphi 0, %s54
      %s55 = sphi 0, %s52
      %s56 = sphi 0, %s55
      %s72 = sphi 0, %s56
      %s78 = sphi 0, %s80
      %s81 = sphi 0, %s78
      %s82 = sphi 0, %s81
      %s98 = sphi 0, %s82
      %s104 = sphi 0, %s106
      %s107 = sphi 0, %s104
      %s108 = sphi 0, %s107
      %s124 = sphi 0, %s108
      %s130 = sphi 0, %s132
      %s133 = sphi 0, %s130
      %s134 = sphi 0, %s133
      %s150 = sphi 0, %s134
      %s154 = sphi 0, %s154
      %s156 = sphi 0, %s154
      %s157 = sphi 0, %s156
      %s171 = sphi 0, %s157
    $region4: #{tpu_custom_call.1} parent=1 // loop_header_branch
      %24 = sbr.rel (%p22) target = $region8
    $region5: #{tpu_custom_call.1} parent=1 // loop_body
      %s26 = ssub.s32 %s21, 1
      %s27 = ssub.s32 %s21, 2
      %s28 = sadd.s32 %s21, 1
      %s30 = sadd.s32 %s29, 1
      %p33 = scmp.eq.s32.totalorder %s21, 1
      %p34 = scmp.ne.s32.totalorder %s29, %s31
      %p35 = scmp.eq.s32.totalorder %s21, 0
      %p36 = por %p34, %p35
      %p37 = scmp.ne.s32.totalorder %s29, %s31
      %p38 = scmp.eq.s32.totalorder %s26, 1
      %p39 = por %p37, %p38
      %p40 = scmp.ne.s32.totalorder %s31, %s32
      %p41 = scmp.eq.s32.totalorder %s26, 0
      %p42 = por %p40, %p41
      %p43 = scmp.ne.s32.totalorder %s31, %s32
      %p44 = scmp.eq.s32.totalorder %s27, 1
      %p45 = por %p43, %p44
      %p47 = scmp.ne.s32.totalorder %s32, %s46
      %p48 = scmp.eq.s32.totalorder %s27, 0
      %p49 = por %p47, %p48
      %s50 = ssub.s32 %s21, %s28
      %p51 = scmp.eq.s32.totalorder %s50, 0
      %s53 = sadd.s32 %s52, 1
      %s54 = scalar_select %p51, %s52, %s53
      %p57 = pneg %p51
      %p58 = scmp.eq.s32.totalorder %s21, 1
      %p59 = por %p57, %p58
      %p60 = scmp.ne.s32.totalorder %s52, %s55
      %p61 = scmp.eq.s32.totalorder %s21, 0
      %p62 = por %p60, %p61
      %p63 = scmp.ne.s32.totalorder %s52, %s55
      %p64 = scmp.eq.s32.totalorder %s26, 1
      %p65 = por %p63, %p64
      %p66 = scmp.ne.s32.totalorder %s55, %s56
      %p67 = scmp.eq.s32.totalorder %s26, 0
      %p68 = por %p66, %p67
      %p69 = scmp.ne.s32.totalorder %s55, %s56
      %p70 = scmp.eq.s32.totalorder %s27, 1
      %p71 = por %p69, %p70
      %p73 = scmp.ne.s32.totalorder %s56, %s72
      %p74 = scmp.eq.s32.totalorder %s27, 0
      %p75 = por %p73, %p74
      %s76 = ssub.s32 %s21, %s28
      %p77 = scmp.eq.s32.totalorder %s76, 0
      %s79 = sadd.s32 %s78, 1
      %s80 = scalar_select %p77, %s78, %s79
      %p83 = pneg %p77
      %p84 = scmp.eq.s32.totalorder %s21, 1
      %p85 = por %p83, %p84
      %p86 = scmp.ne.s32.totalorder %s78, %s81
      %p87 = scmp.eq.s32.totalorder %s21, 0
      %p88 = por %p86, %p87
      %p89 = scmp.ne.s32.totalorder %s78, %s81
      %p90 = scmp.eq.s32.totalorder %s26, 1
      %p91 = por %p89, %p90
      %p92 = scmp.ne.s32.totalorder %s81, %s82
      %p93 = scmp.eq.s32.totalorder %s26, 0
      %p94 = por %p92, %p93
      %p95 = scmp.ne.s32.totalorder %s81, %s82
      %p96 = scmp.eq.s32.totalorder %s27, 1
      %p97 = por %p95, %p96
      %p99 = scmp.ne.s32.totalorder %s82, %s98
      %p100 = scmp.eq.s32.totalorder %s27, 0
      %p101 = por %p99, %p100
      %s102 = ssub.s32 %s21, %s28
      %p103 = scmp.eq.s32.totalorder %s102, 0
      %s105 = sadd.s32 %s104, 1
      %s106 = scalar_select %p103, %s104, %s105
      %p109 = pneg %p103
      %p110 = scmp.eq.s32.totalorder %s21, 1
      %p111 = por %p109, %p110
      %p112 = scmp.ne.s32.totalorder %s104, %s107
      %p113 = scmp.eq.s32.totalorder %s21, 0
      %p114 = por %p112, %p113
      %p115 = scmp.ne.s32.totalorder %s104, %s107
      %p116 = scmp.eq.s32.totalorder %s26, 1
      %p117 = por %p115, %p116
      %p118 = scmp.ne.s32.totalorder %s107, %s108
      %p119 = scmp.eq.s32.totalorder %s26, 0
      %p120 = por %p118, %p119
      %p121 = scmp.ne.s32.totalorder %s107, %s108
      %p122 = scmp.eq.s32.totalorder %s27, 1
      %p123 = por %p121, %p122
      %p125 = scmp.ne.s32.totalorder %s108, %s124
      %p126 = scmp.eq.s32.totalorder %s27, 0
      %p127 = por %p125, %p126
      %s128 = ssub.s32 %s21, %s28
      %p129 = scmp.eq.s32.totalorder %s128, 0
      %s131 = sadd.s32 %s130, 1
      %s132 = scalar_select %p129, %s130, %s131
      %p135 = pneg %p129
      %p136 = scmp.eq.s32.totalorder %s21, 1
      %p137 = por %p135, %p136
      %p138 = scmp.ne.s32.totalorder %s130, %s133
      %p139 = scmp.eq.s32.totalorder %s21, 0
      %p140 = por %p138, %p139
      %p141 = scmp.ne.s32.totalorder %s130, %s133
      %p142 = scmp.eq.s32.totalorder %s26, 1
      %p143 = por %p141, %p142
      %p144 = scmp.ne.s32.totalorder %s133, %s134
      %p145 = scmp.eq.s32.totalorder %s26, 0
      %p146 = por %p144, %p145
      %p147 = scmp.ne.s32.totalorder %s133, %s134
      %p148 = scmp.eq.s32.totalorder %s27, 1
      %p149 = por %p147, %p148
      %p151 = scmp.ne.s32.totalorder %s134, %s150
      %p152 = scmp.eq.s32.totalorder %s27, 0
      %p153 = por %p151, %p152
      %s155 = sadd.s32 %s154, 1
      %p158 = scmp.eq.s32.totalorder %s21, 1
      %p159 = scmp.ne.s32.totalorder %s154, %s156
      %p160 = scmp.eq.s32.totalorder %s21, 0
      %p161 = por %p159, %p160
      %p162 = scmp.ne.s32.totalorder %s154, %s156
      %p163 = scmp.eq.s32.totalorder %s26, 1
      %p164 = por %p162, %p163
      %p165 = scmp.ne.s32.totalorder %s156, %s157
      %p166 = scmp.eq.s32.totalorder %s26, 0
      %p167 = por %p165, %p166
      %p168 = scmp.ne.s32.totalorder %s156, %s157
      %p169 = scmp.eq.s32.totalorder %s27, 1
      %p170 = por %p168, %p169
      %p172 = scmp.ne.s32.totalorder %s157, %s171
      %p173 = scmp.eq.s32.totalorder %s27, 0
      %p174 = por %p172, %p173
      %p175 = scmp.le.s32.totalorder 1, %s21
      %p176 = scmp.lt.s32.totalorder %s21, 3
      %p177 = pnand %p175, %p176
      %p178 = pneg %p177
      // Predicated region
      $region9: #{tpu_custom_call.1} parent=5 // pred_check
        _
      $region10: #{tpu_custom_call.1} parent=5 // pred_check_branch
        %180 = sbr.rel (%p177) target = $region12
      $region11: #{tpu_custom_call.1} parent=5 // pred_region
        %s181 = ssub.s32 %s21, 1
        // Predicated region
        $region13: #{tpu_custom_call.1} parent=11 // pred_check
          %p182 = pneg %p42
        $region14: #{tpu_custom_call.1} parent=11 // pred_check_branch
          %184 = sbr.rel (%p182) target = $region16
        $region15: #{tpu_custom_call.1} parent=11 // pred_region
          %s186 = ssub.s32 896, 896
          %187 = vsyncadd [#allocation7], %s186
          %s188 = sshll.u32 [#allocation6], 4
          %s189 = int_to_ptr.vmem [resolvable:$true] %s188
          %194 = dma.hbm_to_vmem [thread:$0]  %s1, 896, %s189, [#allocation7], 128, 128, 8
        $region16: #{tpu_custom_call.1} parent=11 // pred_fallthru
          _
      $region12: #{tpu_custom_call.1} parent=5 // pred_fallthru
        _
      %p195 = scmp.lt.s32.totalorder %s21, 2
      // Predicated region
      $region17: #{tpu_custom_call.1} parent=5 // pred_check
        %p196 = pneg %p195
      $region18: #{tpu_custom_call.1} parent=5 // pred_check_branch
        %198 = sbr.rel (%p196) target = $region20
      $region19: #{tpu_custom_call.1} parent=5 // pred_region
        // Predicated region
        $region21: #{tpu_custom_call.1} parent=19 // pred_check
          %p199 = pneg %p62
        $region22: #{tpu_custom_call.1} parent=19 // pred_check_branch
          %201 = sbr.rel (%p199) target = $region24
        $region23: #{tpu_custom_call.1} parent=19 // pred_region
          %s202 = sand.u32 %s21, 1
          %s203 = scalar_lea.sflag [#allocation10], %s202
          %s204 = sand.u32 %s52, 1
          %s205 = smul.addr %s204, 384
          %s206 = scalar_lea.vmem [#allocation9], %s205
          %s208 = ssub.s32 6144, 6144
          %209 = vsyncadd %s203, %s208
          %s210 = smul.addr %s21, 48
          %s211 = smul.addr %s210, 128
          %s212 = scalar_lea.hbm %s2, %s211
          %s213 = sshll.u32 %s206, 4
          %s214 = int_to_ptr.vmem [resolvable:$true] %s213
          %219 = dma.hbm_to_vmem [thread:$0]  %s212, 6144, %s214, %s203, 384, 384, 24
        $region24: #{tpu_custom_call.1} parent=19 // pred_fallthru
          _
        // Predicated region
        $region25: #{tpu_custom_call.1} parent=19 // pred_check
          %p220 = pneg %p88
        $region26: #{tpu_custom_call.1} parent=19 // pred_check_branch
          %222 = sbr.rel (%p220) target = $region28
        $region27: #{tpu_custom_call.1} parent=19 // pred_region
          %s223 = sand.u32 %s21, 1
          %s224 = scalar_lea.sflag [#allocation10], %s223
          %s225 = sand.u32 %s78, 1
          %s226 = smul.addr %s225, 384
          %s227 = scalar_lea.vmem [#allocation11], %s226
          %s229 = ssub.s32 6144, 6144
          %230 = vsyncadd %s224, %s229
          %s231 = smul.addr %s21, 48
          %s232 = smul.addr %s231, 128
          %s233 = scalar_lea.hbm %s3, %s232
          %s234 = sshll.u32 %s227, 4
          %s235 = int_to_ptr.vmem [resolvable:$true] %s234
          %240 = dma.hbm_to_vmem [thread:$0]  %s233, 6144, %s235, %s224, 384, 384, 24
        $region28: #{tpu_custom_call.1} parent=19 // pred_fallthru
          _
        // Predicated region
        $region29: #{tpu_custom_call.1} parent=19 // pred_check
          %p241 = pneg %p114
        $region30: #{tpu_custom_call.1} parent=19 // pred_check_branch
          %243 = sbr.rel (%p241) target = $region32
        $region31: #{tpu_custom_call.1} parent=19 // pred_region
          %p244 = scmp.lt.s32.totalorder %s21, 1
          %s245 = scalar_select %p244, %s21, 1
          %s246 = smul.addr %s245, 3
          %s247 = scalar_lea.vmem %s4, %s246
        $region32: #{tpu_custom_call.1} parent=19 // pred_fallthru
          _
        // Predicated region
        $region33: #{tpu_custom_call.1} parent=19 // pred_check
          %p248 = pneg %p140
        $region34: #{tpu_custom_call.1} parent=19 // pred_check_branch
          %250 = sbr.rel (%p248) target = $region36
        $region35: #{tpu_custom_call.1} parent=19 // pred_region
          %p251 = scmp.lt.s32.totalorder %s21, 1
          %s252 = scalar_select %p251, %s21, 1
          %s253 = scalar_lea.vmem %s5, %s252
        $region36: #{tpu_custom_call.1} parent=19 // pred_fallthru
          _
      $region20: #{tpu_custom_call.1} parent=5 // pred_fallthru
        _
      %p254 = scmp.le.s32.totalorder 1, %s21
      %p255 = scmp.lt.s32.totalorder %s21, 3
      %p256 = pnand %p254, %p255
      %p257 = pneg %p256
      // Predicated region
      $region37: #{tpu_custom_call.1} parent=5 // pred_check
        _
      $region38: #{tpu_custom_call.1} parent=5 // pred_check_branch
        %259 = sbr.rel (%p256) target = $region40
      $region39: #{tpu_custom_call.1} parent=5 // pred_region
        %s260 = ssub.s32 %s21, 1
        // Predicated region
        $region41: #{tpu_custom_call.1} parent=39 // pred_check
          %p261 = pneg %p42
        $region42: #{tpu_custom_call.1} parent=39 // pred_check_branch
          %263 = sbr.rel (%p261) target = $region44
        $region43: #{tpu_custom_call.1} parent=39 // pred_region
          %264 = dma.done [#allocation7], 896
        $region44: #{tpu_custom_call.1} parent=39 // pred_fallthru
          _
        %s265 = sand.u32 %s26, 1
        %s266 = scalar_lea.sflag [#allocation10], %s265
        %s267 = sand.u32 %s55, 1
        %s268 = smul.addr %s267, 384
        %s269 = scalar_lea.vmem [#allocation9], %s268
        // Predicated region
        $region45: #{tpu_custom_call.1} parent=39 // pred_check
          %p270 = pneg %p68
        $region46: #{tpu_custom_call.1} parent=39 // pred_check_branch
          %272 = sbr.rel (%p270) target = $region48
        $region47: #{tpu_custom_call.1} parent=39 // pred_region
          %273 = dma.done %s266, 6144
        $region48: #{tpu_custom_call.1} parent=39 // pred_fallthru
          _
        %s274 = sand.u32 %s26, 1
        %s275 = scalar_lea.sflag [#allocation10], %s274
        %s276 = sand.u32 %s81, 1
        %s277 = smul.addr %s276, 384
        %s278 = scalar_lea.vmem [#allocation11], %s277
        // Predicated region
        $region49: #{tpu_custom_call.1} parent=39 // pred_check
          %p279 = pneg %p94
        $region50: #{tpu_custom_call.1} parent=39 // pred_check_branch
          %281 = sbr.rel (%p279) target = $region52
        $region51: #{tpu_custom_call.1} parent=39 // pred_region
          %282 = dma.done %s275, 6144
        $region52: #{tpu_custom_call.1} parent=39 // pred_fallthru
          _
        %p283 = pneg %p42
        %p284 = pneg %p39
        %s285 = sand.u32 %s26, 1
        %s286 = scalar_lea.sflag [#allocation10], %s285
        %s287 = sand.u32 %s55, 1
        %s288 = smul.addr %s287, 384
        %s289 = scalar_lea.vmem [#allocation9], %s288
        %p290 = pneg %p68
        %p291 = pneg %p65
        %s292 = sand.u32 %s26, 1
        %s293 = scalar_lea.sflag [#allocation10], %s292
        %s294 = sand.u32 %s81, 1
        %s295 = smul.addr %s294, 384
        %s296 = scalar_lea.vmem [#allocation11], %s295
        %p297 = pneg %p94
        %p298 = pneg %p91
        %p299 = scmp.lt.s32.totalorder %s26, 1
        %s300 = scalar_select %p299, %s26, 1
        %s301 = smul.addr %s300, 3
        %s302 = scalar_lea.vmem %s4, %s301
        %p303 = pneg %p120
        %p304 = pneg %p117
        %p305 = scmp.lt.s32.totalorder %s26, 1
        %s306 = scalar_select %p305, %s26, 1
        %s307 = scalar_lea.vmem %s5, %s306
        %p308 = pneg %p146
        %p309 = pneg %p143
        %p310 = pneg %p167
        %p311 = pneg %p164
        %p312 = scmp.lt.s32.totalorder %s26, 1
        %s313 = scalar_select %p312, %s26, 1
        %s314 = smul.addr %s313, 3
        %s315 = scalar_lea.vmem %s4, %s314
        %p316 = scmp.lt.s32.totalorder %s26, 1
        %s317 = scalar_select %p316, %s26, 1
        %s318 = scalar_lea.vmem %s5, %s317
        %p319 = scmp.eq.s32.totalorder %s26, 0
        // Predicated region
        $region53: #{tpu_custom_call.1} parent=39 // pred_check
          %p320 = pneg %p319
        $region54: #{tpu_custom_call.1} parent=39 // pred_check_branch
          %322 = sbr.rel (%p320) target = $region56
        $region55: #{tpu_custom_call.1} parent=39 // pred_region
          %s323 = sld [smem:[#allocation5]]
          %s324 = scalar_lea.vmem [#allocation6], %s323
          %v325 = vld [vmem:[%s324] sm:$0x1]
          %326 = vst [vmem:[#allocation2] sm:$0x1] %v325
          %s327 = sld [smem:[#allocation5 + $0x1]]
          %s328 = scalar_lea.vmem [#allocation6], %s327
          %v329 = vld [vmem:[%s328] sm:$0x1]
          %330 = vst [vmem:[#allocation2 + $0x1] sm:$0x1] %v329
          %s331 = sld [smem:[#allocation5 + $0x2]]
          %s332 = scalar_lea.vmem [#allocation6], %s331
          %v333 = vld [vmem:[%s332] sm:$0x1]
          %334 = vst [vmem:[#allocation2 + $0x2] sm:$0x1] %v333
          %s335 = sld [smem:[#allocation5 + $0x3]]
          %s336 = scalar_lea.vmem [#allocation6], %s335
          %v337 = vld [vmem:[%s336] sm:$0x1]
          %338 = vst [vmem:[#allocation2 + $0x3] sm:$0x1] %v337
          %s339 = sld [smem:[#allocation5 + $0x4]]
          %s340 = scalar_lea.vmem [#allocation6], %s339
          %v341 = vld [vmem:[%s340] sm:$0x1]
          %342 = vst [vmem:[#allocation2 + $0x4] sm:$0x1] %v341
          %s343 = sld [smem:[#allocation5 + $0x5]]
          %s344 = scalar_lea.vmem [#allocation6], %s343
          %v345 = vld [vmem:[%s344] sm:$0x1]
          %346 = vst [vmem:[#allocation2 + $0x5] sm:$0x1] %v345
          %s347 = sld [smem:[#allocation5 + $0x6]]
          %s348 = scalar_lea.vmem [#allocation6], %s347
          %v349 = vld [vmem:[%s348] sm:$0x1]
          %350 = vst [vmem:[#allocation2 + $0x6] sm:$0x1] %v349
          %s351 = sld [smem:[#allocation5 + $0x7]]
          %s352 = scalar_lea.vmem [#allocation6], %s351
          %v353 = vld [vmem:[%s352] sm:$0x1]
          %354 = vst [vmem:[#allocation2 + $0x7] sm:$0x1] %v353
        $region56: #{tpu_custom_call.1} parent=39 // pred_fallthru
          _
        %v355 = vld [vmem:[#allocation2] sm:$0xff]
        %v356 = vld [vmem:[%s269] sm:$0xff]
        %v357 = vld [vmem:[%s269 + $0x8] sm:$0xff]
        %v358 = vld [vmem:[%s269 + $0x10] sm:$0xff]
        %v359 = vld [vmem:[%s269 + $0x18] sm:$0xff]
        %v360 = vld [vmem:[%s269 + $0x20] sm:$0xff]
        %v361 = vld [vmem:[%s269 + $0x28] sm:$0xff]
        %v362 = vld [vmem:[%s269 + $0x30] sm:$0xff]
        %v363 = vld [vmem:[%s269 + $0x38] sm:$0xff]
        %v364 = vld [vmem:[%s269 + $0x40] sm:$0xff]
        %v365 = vld [vmem:[%s269 + $0x48] sm:$0xff]
        %v366 = vld [vmem:[%s269 + $0x50] sm:$0xff]
        %v367 = vld [vmem:[%s269 + $0x58] sm:$0xff]
        %v368 = vld [vmem:[%s269 + $0x60] sm:$0xff]
        %v369 = vld [vmem:[%s269 + $0x68] sm:$0xff]
        %v370 = vld [vmem:[%s269 + $0x70] sm:$0xff]
        %v371 = vld [vmem:[%s269 + $0x78] sm:$0xff]
        %v372 = vld [vmem:[%s269 + $0x80] sm:$0xff]
        %v373 = vld [vmem:[%s269 + $0x88] sm:$0xff]
        %v374 = vld [vmem:[%s269 + $0x90] sm:$0xff]
        %v375 = vld [vmem:[%s269 + $0x98] sm:$0xff]
        %v376 = vld [vmem:[%s269 + $0xa0] sm:$0xff]
        %v377 = vld [vmem:[%s269 + $0xa8] sm:$0xff]
        %v378 = vld [vmem:[%s269 + $0xb0] sm:$0xff]
        %v379 = vld [vmem:[%s269 + $0xb8] sm:$0xff]
        %v380 = vld [vmem:[%s269 + $0xc0] sm:$0xff]
        %v381 = vld [vmem:[%s269 + $0xc8] sm:$0xff]
        %v382 = vld [vmem:[%s269 + $0xd0] sm:$0xff]
        %v383 = vld [vmem:[%s269 + $0xd8] sm:$0xff]
        %v384 = vld [vmem:[%s269 + $0xe0] sm:$0xff]
        %v385 = vld [vmem:[%s269 + $0xe8] sm:$0xff]
        %v386 = vld [vmem:[%s269 + $0xf0] sm:$0xff]
        %v387 = vld [vmem:[%s269 + $0xf8] sm:$0xff]
        %v388 = vld [vmem:[%s269 + $0x100] sm:$0xff]
        %v389 = vld [vmem:[%s269 + $0x108] sm:$0xff]
        %v390 = vld [vmem:[%s269 + $0x110] sm:$0xff]
        %v391 = vld [vmem:[%s269 + $0x118] sm:$0xff]
        %v392 = vld [vmem:[%s269 + $0x120] sm:$0xff]
        %v393 = vld [vmem:[%s269 + $0x128] sm:$0xff]
        %v394 = vld [vmem:[%s269 + $0x130] sm:$0xff]
        %v395 = vld [vmem:[%s269 + $0x138] sm:$0xff]
        %v396 = vld [vmem:[%s269 + $0x140] sm:$0xff]
        %v397 = vld [vmem:[%s269 + $0x148] sm:$0xff]
        %v398 = vld [vmem:[%s269 + $0x150] sm:$0xff]
        %v399 = vld [vmem:[%s269 + $0x158] sm:$0xff]
        %v400 = vld [vmem:[%s269 + $0x160] sm:$0xff]
        %v401 = vld [vmem:[%s269 + $0x168] sm:$0xff]
        %v402 = vld [vmem:[%s269 + $0x170] sm:$0xff]
        %v403 = vld [vmem:[%s269 + $0x178] sm:$0xff]
        %v404 = vld [vmem:[%s315] sm:$0x7]
        %v406 = vlaneseq
        %v407 = vshrl.u32 %v406, 7
        %v408 = vsub.s32 0, %v407
        %v409 = vrot.slane %v404, %v408
        %v410 = vlaneseq
        %v411 = vshrl.u32 %v410, 7
        %v412 = vsub.s32 1, %v411
        %v413 = vrot.slane %v404, %v412
        %v414 = vlaneseq
        %v415 = vshrl.u32 %v414, 7
        %v416 = vsub.s32 2, %v415
        %v417 = vrot.slane %v404, %v416
        %421 = vmatprep.subr.mxu0 %v357
        %422 = vmatpush1.msra.mxu0 %v356
        %423 = vmatprep.subr.mxu0 %v360
        %424 = vmatpush1.msra.mxu0 %v359
        %425 = vmatprep.subr.mxu0 %v363
        %426 = vmatpush1.msra.mxu0 %v362
        %427 = vmatprep.subr.mxu0 %v366
        %428 = vmatpush1.msra.mxu0 %v365
        %429 = vmatprep.subr.mxu0 %v369
        %430 = vmatpush1.msra.mxu0 %v368
        %431 = vmatprep.subr.mxu0 %v372
        %432 = vmatpush1.msra.mxu0 %v371
        %433 = vmatprep.subr.mxu0 %v375
        %434 = vmatpush1.msra.mxu0 %v374
        %435 = vmatprep.subr.mxu0 %v378
        %436 = vmatpush1.msra.mxu0 %v377
        %437 = vmatprep.subr.mxu0 %v381
        %438 = vmatpush1.msra.mxu0 %v380
        %439 = vmatprep.subr.mxu0 %v384
        %440 = vmatpush1.msra.mxu0 %v383
        %441 = vmatprep.subr.mxu0 %v387
        %442 = vmatpush1.msra.mxu0 %v386
        %443 = vmatprep.subr.mxu0 %v390
        %444 = vmatpush1.msra.mxu0 %v389
        %445 = vmatprep.subr.mxu0 %v393
        %446 = vmatpush1.msra.mxu0 %v392
        %447 = vmatprep.subr.mxu0 %v396
        %448 = vmatpush1.msra.mxu0 %v395
        %449 = vmatprep.subr.mxu0 %v399
        %450 = vmatpush1.msra.mxu0 %v398
        %451 = vmatprep.subr.mxu0 %v402
        %452 = vmatpush1.msra.mxu0 %v401
        %453 = vmatprep.subr.mxu0 0.0
        %454 = vmatpush1.msra.mxu0 0.0
        %455 = vmatprep.subr.mxu0 0.0
        %456 = vmatpush1.msra.mxu0 0.0
        %457 = vmatprep.subr.mxu0 0.0
        %458 = vmatpush1.msra.mxu0 0.0
        %459 = vmatprep.subr.mxu0 0.0
        %460 = vmatpush1.msra.mxu0 0.0
        %461 = vmatprep.subr.mxu0 0.0
        %462 = vmatpush1.msra.mxu0 0.0
        %463 = vmatprep.subr.mxu0 0.0
        %464 = vmatpush1.msra.mxu0 0.0
        %465 = vmatprep.subr.mxu0 0.0
        %466 = vmatpush1.msra.mxu0 0.0
        %467 = vmatprep.subr.mxu0 0.0
        %468 = vmatpush1.msra.mxu0 0.0
        %469 = vmatprep.subr.mxu0 0.0
        %470 = vmatpush1.msra.mxu0 0.0
        %471 = vmatprep.subr.mxu0 0.0
        %472 = vmatpush1.msra.mxu0 0.0
        %473 = vmatprep.subr.mxu0 0.0
        %474 = vmatpush1.msra.mxu0 0.0
        %475 = vmatprep.subr.mxu0 0.0
        %476 = vmatpush1.msra.mxu0 0.0
        %477 = vmatprep.subr.mxu0 0.0
        %478 = vmatpush1.msra.mxu0 0.0
        %479 = vmatprep.subr.mxu0 0.0
        %480 = vmatpush1.msra.mxu0 0.0
        %481 = vmatprep.subr.mxu0 0.0
        %482 = vmatpush1.msra.mxu0 0.0
        %483 = vmatprep.subr.mxu0 0.0
        %484 = vmatpush1.msra.mxu0 0.0
        %485 = vmatprep.mubr.f32.mxu0 0.0
        %486 = vmatmul.mubr.f32.gmra.mrb[0].mxu0 %v355
        %v487 = vpop.f32.mrb[0].mxu0
        %v488 = vadd.f32 %v409, %v487
        %v489 = vpop.f32.mrb[0].mxu0
        %v490 = vadd.f32 %v413, %v489
        %491 = vdwg.mxu0
        %492 = vmatprep.subr.mxu0 0.0
        %493 = vmatpush1.msra.mxu0 %v358
        %494 = vmatprep.subr.mxu0 0.0
        %495 = vmatpush1.msra.mxu0 %v361
        %496 = vmatprep.subr.mxu0 0.0
        %497 = vmatpush1.msra.mxu0 %v364
        %498 = vmatprep.subr.mxu0 0.0
        %499 = vmatpush1.msra.mxu0 %v367
        %500 = vmatprep.subr.mxu0 0.0
        %501 = vmatpush1.msra.mxu0 %v370
        %502 = vmatprep.subr.mxu0 0.0
        %503 = vmatpush1.msra.mxu0 %v373
        %504 = vmatprep.subr.mxu0 0.0
        %505 = vmatpush1.msra.mxu0 %v376
        %506 = vmatprep.subr.mxu0 0.0
        %507 = vmatpush1.msra.mxu0 %v379
        %508 = vmatprep.subr.mxu0 0.0
        %509 = vmatpush1.msra.mxu0 %v382
        %510 = vmatprep.subr.mxu0 0.0
        %511 = vmatpush1.msra.mxu0 %v385
        %512 = vmatprep.subr.mxu0 0.0
        %513 = vmatpush1.msra.mxu0 %v388
        %514 = vmatprep.subr.mxu0 0.0
        %515 = vmatpush1.msra.mxu0 %v391
        %516 = vmatprep.subr.mxu0 0.0
        %517 = vmatpush1.msra.mxu0 %v394
        %518 = vmatprep.subr.mxu0 0.0
        %519 = vmatpush1.msra.mxu0 %v397
        %520 = vmatprep.subr.mxu0 0.0
        %521 = vmatpush1.msra.mxu0 %v400
        %522 = vmatprep.subr.mxu0 0.0
        %523 = vmatpush1.msra.mxu0 %v403
        %524 = vmatprep.subr.mxu0 0.0
        %525 = vmatpush1.msra.mxu0 0.0
        %526 = vmatprep.subr.mxu0 0.0
        %527 = vmatpush1.msra.mxu0 0.0
        %528 = vmatprep.subr.mxu0 0.0
        %529 = vmatpush1.msra.mxu0 0.0
        %530 = vmatprep.subr.mxu0 0.0
        %531 = vmatpush1.msra.mxu0 0.0
        %532 = vmatprep.subr.mxu0 0.0
        %533 = vmatpush1.msra.mxu0 0.0
        %534 = vmatprep.subr.mxu0 0.0
        %535 = vmatpush1.msra.mxu0 0.0
        %536 = vmatprep.subr.mxu0 0.0
        %537 = vmatpush1.msra.mxu0 0.0
        %538 = vmatprep.subr.mxu0 0.0
        %539 = vmatpush1.msra.mxu0 0.0
        %540 = vmatprep.subr.mxu0 0.0
        %541 = vmatpush1.msra.mxu0 0.0
        %542 = vmatprep.subr.mxu0 0.0
        %543 = vmatpush1.msra.mxu0 0.0
        %544 = vmatprep.subr.mxu0 0.0
        %545 = vmatpush1.msra.mxu0 0.0
        %546 = vmatprep.subr.mxu0 0.0
        %547 = vmatpush1.msra.mxu0 0.0
        %548 = vmatprep.subr.mxu0 0.0
        %549 = vmatpush1.msra.mxu0 0.0
        %550 = vmatprep.subr.mxu0 0.0
        %551 = vmatpush1.msra.mxu0 0.0
        %552 = vmatprep.subr.mxu0 0.0
        %553 = vmatpush1.msra.mxu0 0.0
        %554 = vmatprep.subr.mxu0 0.0
        %555 = vmatpush1.msra.mxu0 0.0
        %556 = vmatprep.mubr.f32.mxu0 0.0
        %557 = vmatmul.mubr.f32.gmra.mrb[0].mxu0 %v355
        %v558 = vpop.f32.mrb[0].mxu0
        %v559 = vadd.f32 %v417, %v558
        %v560 = vpop.f32.mrb[0].mxu0
        %561 = vdwg.mxu0
        %562 = vst [vmem:[#allocation3] sm:$0xff] %v488
        %563 = vst [vmem:[#allocation3 + $0x8] sm:$0xff] %v490
        %564 = vst [vmem:[#allocation3 + $0x10] sm:$0xff] %v559
        %v565 = vld [vmem:[%s278] sm:$0xff]
        %v566 = vld [vmem:[%s278 + $0x8] sm:$0xff]
        %v567 = vld [vmem:[%s278 + $0x10] sm:$0xff]
        %v568 = vld [vmem:[%s278 + $0x18] sm:$0xff]
        %v569 = vld [vmem:[%s278 + $0x20] sm:$0xff]
        %v570 = vld [vmem:[%s278 + $0x28] sm:$0xff]
        %v571 = vld [vmem:[%s278 + $0x30] sm:$0xff]
        %v572 = vld [vmem:[%s278 + $0x38] sm:$0xff]
        %v573 = vld [vmem:[%s278 + $0x40] sm:$0xff]
        %v574 = vld [vmem:[%s278 + $0x48] sm:$0xff]
        %v575 = vld [vmem:[%s278 + $0x50] sm:$0xff]
        %v576 = vld [vmem:[%s278 + $0x58] sm:$0xff]
        %v577 = vld [vmem:[%s278 + $0x60] sm:$0xff]
        %v578 = vld [vmem:[%s278 + $0x68] sm:$0xff]
        %v579 = vld [vmem:[%s278 + $0x70] sm:$0xff]
        %v580 = vld [vmem:[%s278 + $0x78] sm:$0xff]
        %v581 = vld [vmem:[%s278 + $0x80] sm:$0xff]
        %v582 = vld [vmem:[%s278 + $0x88] sm:$0xff]
        %v583 = vld [vmem:[%s278 + $0x90] sm:$0xff]
        %v584 = vld [vmem:[%s278 + $0x98] sm:$0xff]
        %v585 = vld [vmem:[%s278 + $0xa0] sm:$0xff]
        %v586 = vld [vmem:[%s278 + $0xa8] sm:$0xff]
        %v587 = vld [vmem:[%s278 + $0xb0] sm:$0xff]
        %v588 = vld [vmem:[%s278 + $0xb8] sm:$0xff]
        %v589 = vld [vmem:[%s278 + $0xc0] sm:$0xff]
        %v590 = vld [vmem:[%s278 + $0xc8] sm:$0xff]
        %v591 = vld [vmem:[%s278 + $0xd0] sm:$0xff]
        %v592 = vld [vmem:[%s278 + $0xd8] sm:$0xff]
        %v593 = vld [vmem:[%s278 + $0xe0] sm:$0xff]
        %v594 = vld [vmem:[%s278 + $0xe8] sm:$0xff]
        %v595 = vld [vmem:[%s278 + $0xf0] sm:$0xff]
        %v596 = vld [vmem:[%s278 + $0xf8] sm:$0xff]
        %v597 = vld [vmem:[%s278 + $0x100] sm:$0xff]
        %v598 = vld [vmem:[%s278 + $0x108] sm:$0xff]
        %v599 = vld [vmem:[%s278 + $0x110] sm:$0xff]
        %v600 = vld [vmem:[%s278 + $0x118] sm:$0xff]
        %v601 = vld [vmem:[%s278 + $0x120] sm:$0xff]
        %v602 = vld [vmem:[%s278 + $0x128] sm:$0xff]
        %v603 = vld [vmem:[%s278 + $0x130] sm:$0xff]
        %v604 = vld [vmem:[%s278 + $0x138] sm:$0xff]
        %v605 = vld [vmem:[%s278 + $0x140] sm:$0xff]
        %v606 = vld [vmem:[%s278 + $0x148] sm:$0xff]
        %v607 = vld [vmem:[%s278 + $0x150] sm:$0xff]
        %v608 = vld [vmem:[%s278 + $0x158] sm:$0xff]
        %v609 = vld [vmem:[%s278 + $0x160] sm:$0xff]
        %v610 = vld [vmem:[%s278 + $0x168] sm:$0xff]
        %v611 = vld [vmem:[%s278 + $0x170] sm:$0xff]
        %v612 = vld [vmem:[%s278 + $0x178] sm:$0xff]
        %v613 = vld [vmem:[%s318] sm:$0x1]
        %v614 = vld [vmem:[#allocation3] ss:$8 sm:$0x7]
        %615 = vmatprep.subr.mxu0 %v566
        %616 = vmatpush1.msra.mxu0 %v565
        %617 = vmatprep.subr.mxu0 %v569
        %618 = vmatpush1.msra.mxu0 %v568
        %619 = vmatprep.subr.mxu0 %v572
        %620 = vmatpush1.msra.mxu0 %v571
        %621 = vmatprep.subr.mxu0 %v575
        %622 = vmatpush1.msra.mxu0 %v574
        %623 = vmatprep.subr.mxu0 %v578
        %624 = vmatpush1.msra.mxu0 %v577
        %625 = vmatprep.subr.mxu0 %v581
        %626 = vmatpush1.msra.mxu0 %v580
        %627 = vmatprep.subr.mxu0 %v584
        %628 = vmatpush1.msra.mxu0 %v583
        %629 = vmatprep.subr.mxu0 %v587
        %630 = vmatpush1.msra.mxu0 %v586
        %631 = vmatprep.subr.mxu0 %v590
        %632 = vmatpush1.msra.mxu0 %v589
        %633 = vmatprep.subr.mxu0 %v593
        %634 = vmatpush1.msra.mxu0 %v592
        %635 = vmatprep.subr.mxu0 %v596
        %636 = vmatpush1.msra.mxu0 %v595
        %637 = vmatprep.subr.mxu0 %v599
        %638 = vmatpush1.msra.mxu0 %v598
        %639 = vmatprep.subr.mxu0 %v602
        %640 = vmatpush1.msra.mxu0 %v601
        %641 = vmatprep.subr.mxu0 %v605
        %642 = vmatpush1.msra.mxu0 %v604
        %643 = vmatprep.subr.mxu0 %v608
        %644 = vmatpush1.msra.mxu0 %v607
        %645 = vmatprep.subr.mxu0 %v611
        %646 = vmatpush1.msra.mxu0 %v610
        %647 = vmatprep.subr.mxu0 0.0
        %648 = vmatpush1.msra.mxu0 0.0
        %649 = vmatprep.subr.mxu0 0.0
        %650 = vmatpush1.msra.mxu0 0.0
        %651 = vmatprep.subr.mxu0 0.0
        %652 = vmatpush1.msra.mxu0 0.0
        %653 = vmatprep.subr.mxu0 0.0
        %654 = vmatpush1.msra.mxu0 0.0
        %655 = vmatprep.subr.mxu0 0.0
        %656 = vmatpush1.msra.mxu0 0.0
        %657 = vmatprep.subr.mxu0 0.0
        %658 = vmatpush1.msra.mxu0 0.0
        %659 = vmatprep.subr.mxu0 0.0
        %660 = vmatpush1.msra.mxu0 0.0
        %661 = vmatprep.subr.mxu0 0.0
        %662 = vmatpush1.msra.mxu0 0.0
        %663 = vmatprep.subr.mxu0 0.0
        %664 = vmatpush1.msra.mxu0 0.0
        %665 = vmatprep.subr.mxu0 0.0
        %666 = vmatpush1.msra.mxu0 0.0
        %667 = vmatprep.subr.mxu0 0.0
        %668 = vmatpush1.msra.mxu0 0.0
        %669 = vmatprep.subr.mxu0 0.0
        %670 = vmatpush1.msra.mxu0 0.0
        %671 = vmatprep.subr.mxu0 0.0
        %672 = vmatpush1.msra.mxu0 0.0
        %673 = vmatprep.subr.mxu0 0.0
        %674 = vmatpush1.msra.mxu0 0.0
        %675 = vmatprep.subr.mxu0 0.0
        %676 = vmatpush1.msra.mxu0 0.0
        %677 = vmatprep.subr.mxu0 0.0
        %678 = vmatpush1.msra.mxu0 0.0
        %679 = vmatprep.mubr.f32.mxu0 0.0
        %680 = vmatmul.mubr.f32.gmra.mrb[0].mxu0 0.0
        %v681 = vpop.f32.mrb[0].mxu0
        %v682 = vadd.f32 0.0, %v681
        %v683 = vpop.f32.mrb[0].mxu0
        %v684 = vadd.f32 0.0, %v683
        %685 = vdwg.mxu0
        %686 = vmatprep.subr.mxu0 0.0
        %687 = vmatpush1.msra.mxu0 %v567
        %688 = vmatprep.subr.mxu0 0.0
        %689 = vmatpush1.msra.mxu0 %v570
        %690 = vmatprep.subr.mxu0 0.0
        %691 = vmatpush1.msra.mxu0 %v573
        %692 = vmatprep.subr.mxu0 0.0
        %693 = vmatpush1.msra.mxu0 %v576
        %694 = vmatprep.subr.mxu0 0.0
        %695 = vmatpush1.msra.mxu0 %v579
        %696 = vmatprep.subr.mxu0 0.0
        %697 = vmatpush1.msra.mxu0 %v582
        %698 = vmatprep.subr.mxu0 0.0
        %699 = vmatpush1.msra.mxu0 %v585
        %700 = vmatprep.subr.mxu0 0.0
        %701 = vmatpush1.msra.mxu0 %v588
        %702 = vmatprep.subr.mxu0 0.0
        %703 = vmatpush1.msra.mxu0 %v591
        %704 = vmatprep.subr.mxu0 0.0
        %705 = vmatpush1.msra.mxu0 %v594
        %706 = vmatprep.subr.mxu0 0.0
        %707 = vmatpush1.msra.mxu0 %v597
        %708 = vmatprep.subr.mxu0 0.0
        %709 = vmatpush1.msra.mxu0 %v600
        %710 = vmatprep.subr.mxu0 0.0
        %711 = vmatpush1.msra.mxu0 %v603
        %712 = vmatprep.subr.mxu0 0.0
        %713 = vmatpush1.msra.mxu0 %v606
        %714 = vmatprep.subr.mxu0 0.0
        %715 = vmatpush1.msra.mxu0 %v609
        %716 = vmatprep.subr.mxu0 0.0
        %717 = vmatpush1.msra.mxu0 %v612
        %718 = vmatprep.subr.mxu0 0.0
        %719 = vmatpush1.msra.mxu0 0.0
        %720 = vmatprep.subr.mxu0 0.0
        %721 = vmatpush1.msra.mxu0 0.0
        %722 = vmatprep.subr.mxu0 0.0
        %723 = vmatpush1.msra.mxu0 0.0
        %724 = vmatprep.subr.mxu0 0.0
        %725 = vmatpush1.msra.mxu0 0.0
        %726 = vmatprep.subr.mxu0 0.0
        %727 = vmatpush1.msra.mxu0 0.0
        %728 = vmatprep.subr.mxu0 0.0
        %729 = vmatpush1.msra.mxu0 0.0
        %730 = vmatprep.subr.mxu0 0.0
        %731 = vmatpush1.msra.mxu0 0.0
        %732 = vmatprep.subr.mxu0 0.0
        %733 = vmatpush1.msra.mxu0 0.0
        %734 = vmatprep.subr.mxu0 0.0
        %735 = vmatpush1.msra.mxu0 0.0
        %736 = vmatprep.subr.mxu0 0.0
        %737 = vmatpush1.msra.mxu0 0.0
        %738 = vmatprep.subr.mxu0 0.0
        %739 = vmatpush1.msra.mxu0 0.0
        %740 = vmatprep.subr.mxu0 0.0
        %741 = vmatpush1.msra.mxu0 0.0
        %742 = vmatprep.subr.mxu0 0.0
        %743 = vmatpush1.msra.mxu0 0.0
        %744 = vmatprep.subr.mxu0 0.0
        %745 = vmatpush1.msra.mxu0 0.0
        %746 = vmatprep.subr.mxu0 0.0
        %747 = vmatpush1.msra.mxu0 0.0
        %748 = vmatprep.subr.mxu0 0.0
        %749 = vmatpush1.msra.mxu0 0.0
        %750 = vmatprep.mubr.f32.mxu0 0.0
        %751 = vmatmul.mubr.f32.gmra.mrb[0].mxu0 0.0
        %v752 = vpop.f32.mrb[0].mxu0
        %v753 = vadd.f32 0.0, %v752
        %v754 = vpop.f32.mrb[0].mxu0
        %755 = vdwg.mxu0
        %v758 = vcombine.low %v682, %v684
        %v760 = vunpack.c.l.s4 1966171168
        %v761 = vunpack.c.0.s8 %v760
        %v762 = vlaneseq
        %v763 = vshrl.u32 %v762, 7
        %v764 = vsub.s32 %v761, %v763
        %v765 = vrot.slane %v758, %v764
        %v767 = vunpack.c.l.s4 1966171168
        %v768 = vunpack.c.0.s8 %v767
        %v769 = vlaneseq
        %v770 = vshrl.u32 %v769, 7
        %v771 = vsub.s32 %v768, %v770
        %v772 = vrot.slane %v765, %v771
        %v774 = vadd.f32 %v614, %v772
        %v775 = vxor.u32 %v774, 2147483648
        %v776 = vmul.f32 %v775, 1.442695
        %v777 = vpow.pop %v776
        %v778 = vadd.f32 %v777, 1.0
        %v779 = vrcp.pop %v778
        %v780 = vmul.f32 1.0, %v779
        %v781 = vadd.f32 %v753, %v613
        %v782 = vmul.f32 %v780, %v781
        %v784 = vrot.slane %v614, 2
        %v786 = vadd.f32 %v784, %v782
        %v787 = vtanh.pop %v786
        %v788 = vsub.f32 0.0, %v787
        %v790 = vrot.slane %v780, 1
        %v792 = vmul.f32 %v790, %v788
        %v793 = vadd.f32 %v787, %v792
        %794 = vst [vmem:[#allocation2] sm:$0x1] %v793
        %s795 = scalar_lea.vmem [#allocation3], 1
        %v796 = vld [vmem:[%s795] ss:$8 sm:$0x7]
        %797 = vmatprep.subr.mxu0 %v566
        %798 = vmatpush1.msra.mxu0 %v565
        %799 = vmatprep.subr.mxu0 %v569
        %800 = vmatpush1.msra.mxu0 %v568
        %801 = vmatprep.subr.mxu0 %v572
        %802 = vmatpush1.msra.mxu0 %v571
        %803 = vmatprep.subr.mxu0 %v575
        %804 = vmatpush1.msra.mxu0 %v574
        %805 = vmatprep.subr.mxu0 %v578
        %806 = vmatpush1.msra.mxu0 %v577
        %807 = vmatprep.subr.mxu0 %v581
        %808 = vmatpush1.msra.mxu0 %v580
        %809 = vmatprep.subr.mxu0 %v584
        %810 = vmatpush1.msra.mxu0 %v583
        %811 = vmatprep.subr.mxu0 %v587
        %812 = vmatpush1.msra.mxu0 %v586
        %813 = vmatprep.subr.mxu0 %v590
        %814 = vmatpush1.msra.mxu0 %v589
        %815 = vmatprep.subr.mxu0 %v593
        %816 = vmatpush1.msra.mxu0 %v592
        %817 = vmatprep.subr.mxu0 %v596
        %818 = vmatpush1.msra.mxu0 %v595
        %819 = vmatprep.subr.mxu0 %v599
        %820 = vmatpush1.msra.mxu0 %v598
        %821 = vmatprep.subr.mxu0 %v602
        %822 = vmatpush1.msra.mxu0 %v601
        %823 = vmatprep.subr.mxu0 %v605
        %824 = vmatpush1.msra.mxu0 %v604
        %825 = vmatprep.subr.mxu0 %v608
        %826 = vmatpush1.msra.mxu0 %v607
        %827 = vmatprep.subr.mxu0 %v611
        %828 = vmatpush1.msra.mxu0 %v610
        %829 = vmatprep.subr.mxu0 0.0
        %830 = vmatpush1.msra.mxu0 0.0
        %831 = vmatprep.subr.mxu0 0.0
        %832 = vmatpush1.msra.mxu0 0.0
        %833 = vmatprep.subr.mxu0 0.0
        %834 = vmatpush1.msra.mxu0 0.0
        %835 = vmatprep.subr.mxu0 0.0
        %836 = vmatpush1.msra.mxu0 0.0
        %837 = vmatprep.subr.mxu0 0.0
        %838 = vmatpush1.msra.mxu0 0.0
        %839 = vmatprep.subr.mxu0 0.0
        %840 = vmatpush1.msra.mxu0 0.0
        %841 = vmatprep.subr.mxu0 0.0
        %842 = vmatpush1.msra.mxu0 0.0
        %843 = vmatprep.subr.mxu0 0.0
        %844 = vmatpush1.msra.mxu0 0.0
        %845 = vmatprep.subr.mxu0 0.0
        %846 = vmatpush1.msra.mxu0 0.0
        %847 = vmatprep.subr.mxu0 0.0
        %848 = vmatpush1.msra.mxu0 0.0
        %849 = vmatprep.subr.mxu0 0.0
        %850 = vmatpush1.msra.mxu0 0.0
        %851 = vmatprep.subr.mxu0 0.0
        %852 = vmatpush1.msra.mxu0 0.0
        %853 = vmatprep.subr.mxu0 0.0
        %854 = vmatpush1.msra.mxu0 0.0
        %855 = vmatprep.subr.mxu0 0.0
        %856 = vmatpush1.msra.mxu0 0.0
        %857 = vmatprep.subr.mxu0 0.0
        %858 = vmatpush1.msra.mxu0 0.0
        %859 = vmatprep.subr.mxu0 0.0
        %860 = vmatpush1.msra.mxu0 0.0
        %861 = vmatprep.mubr.f32.mxu0 0.0
        %862 = vmatmul.mubr.f32.gmra.mrb[0].mxu0 %v793
        %v863 = vpop.f32.mrb[0].mxu0
        %v864 = vadd.f32 0.0, %v863
        %v865 = vpop.f32.mrb[0].mxu0
        %v866 = vadd.f32 0.0, %v865
        %867 = vdwg.mxu0
        %868 = vmatprep.subr.mxu0 0.0
        %869 = vmatpush1.msra.mxu0 %v567
        %870 = vmatprep.subr.mxu0 0.0
        %871 = vmatpush1.msra.mxu0 %v570
        %872 = vmatprep.subr.mxu0 0.0
        %873 = vmatpush1.msra.mxu0 %v573
        %874 = vmatprep.subr.mxu0 0.0
        %875 = vmatpush1.msra.mxu0 %v576
        %876 = vmatprep.subr.mxu0 0.0
        %877 = vmatpush1.msra.mxu0 %v579
        %878 = vmatprep.subr.mxu0 0.0
        %879 = vmatpush1.msra.mxu0 %v582
        %880 = vmatprep.subr.mxu0 0.0
        %881 = vmatpush1.msra.mxu0 %v585
        %882 = vmatprep.subr.mxu0 0.0
        %883 = vmatpush1.msra.mxu0 %v588
        %884 = vmatprep.subr.mxu0 0.0
        %885 = vmatpush1.msra.mxu0 %v591
        %886 = vmatprep.subr.mxu0 0.0
        %887 = vmatpush1.msra.mxu0 %v594
        %888 = vmatprep.subr.mxu0 0.0
        %889 = vmatpush1.msra.mxu0 %v597
        %890 = vmatprep.subr.mxu0 0.0
        %891 = vmatpush1.msra.mxu0 %v600
        %892 = vmatprep.subr.mxu0 0.0
        %893 = vmatpush1.msra.mxu0 %v603
        %894 = vmatprep.subr.mxu0 0.0
        %895 = vmatpush1.msra.mxu0 %v606
        %896 = vmatprep.subr.mxu0 0.0
        %897 = vmatpush1.msra.mxu0 %v609
        %898 = vmatprep.subr.mxu0 0.0
        %899 = vmatpush1.msra.mxu0 %v612
        %900 = vmatprep.subr.mxu0 0.0
        %901 = vmatpush1.msra.mxu0 0.0
        %902 = vmatprep.subr.mxu0 0.0
        %903 = vmatpush1.msra.mxu0 0.0
        %904 = vmatprep.subr.mxu0 0.0
        %905 = vmatpush1.msra.mxu0 0.0
        %906 = vmatprep.subr.mxu0 0.0
        %907 = vmatpush1.msra.mxu0 0.0
        %908 = vmatprep.subr.mxu0 0.0
        %909 = vmatpush1.msra.mxu0 0.0
        %910 = vmatprep.subr.mxu0 0.0
        %911 = vmatpush1.msra.mxu0 0.0
        %912 = vmatprep.subr.mxu0 0.0
        %913 = vmatpush1.msra.mxu0 0.0
        %914 = vmatprep.subr.mxu0 0.0
        %915 = vmatpush1.msra.mxu0 0.0
        %916 = vmatprep.subr.mxu0 0.0
        %917 = vmatpush1.msra.mxu0 0.0
        %918 = vmatprep.subr.mxu0 0.0
        %919 = vmatpush1.msra.mxu0 0.0
        %920 = vmatprep.subr.mxu0 0.0
        %921 = vmatpush1.msra.mxu0 0.0
        %922 = vmatprep.subr.mxu0 0.0
        %923 = vmatpush1.msra.mxu0 0.0
        %924 = vmatprep.subr.mxu0 0.0
        %925 = vmatpush1.msra.mxu0 0.0
        %926 = vmatprep.subr.mxu0 0.0
        %927 = vmatpush1.msra.mxu0 0.0
        %928 = vmatprep.subr.mxu0 0.0
        %929 = vmatpush1.msra.mxu0 0.0
        %930 = vmatprep.subr.mxu0 0.0
        %931 = vmatpush1.msra.mxu0 0.0
        %932 = vmatprep.mubr.f32.mxu0 0.0
        %933 = vmatmul.mubr.f32.gmra.mrb[0].mxu0 %v793
        %v934 = vpop.f32.mrb[0].mxu0
        %v935 = vadd.f32 0.0, %v934
        %v936 = vpop.f32.mrb[0].mxu0
        %937 = vdwg.mxu0
        %v940 = vcombine.low %v864, %v866
        %v942 = vunpack.c.l.s4 1966171168
        %v943 = vunpack.c.0.s8 %v942
        %v944 = vlaneseq
        %v945 = vshrl.u32 %v944, 7
        %v946 = vsub.s32 %v943, %v945
        %v947 = vrot.slane %v940, %v946
        %v949 = vunpack.c.l.s4 1966171168
        %v950 = vunpack.c.0.s8 %v949
        %v951 = vlaneseq
        %v952 = vshrl.u32 %v951, 7
        %v953 = vsub.s32 %v950, %v952
        %v954 = vrot.slane %v947, %v953
        %v956 = vadd.f32 %v796, %v954
        %v957 = vxor.u32 %v956, 2147483648
        %v958 = vmul.f32 %v957, 1.442695
        %v959 = vpow.pop %v958
        %v960 = vadd.f32 %v959, 1.0
        %v961 = vrcp.pop %v960
        %v962 = vmul.f32 1.0, %v961
        %v963 = vadd.f32 %v935, %v613
        %v964 = vmul.f32 %v962, %v963
        %v966 = vrot.slane %v796, 2
        %v968 = vadd.f32 %v966, %v964
        %v969 = vtanh.pop %v968
        %v970 = vsub.f32 %v793, %v969
        %v972 = vrot.slane %v962, 1
        %v974 = vmul.f32 %v972, %v970
        %v975 = vadd.f32 %v969, %v974
        %976 = vst [vmem:[#allocation2 + $0x1] sm:$0x1] %v975
        %s977 = scalar_lea.vmem [#allocation3], 2
        %v978 = vld [vmem:[%s977] ss:$8 sm:$0x7]
        %979 = vmatprep.subr.mxu0 %v566
        %980 = vmatpush1.msra.mxu0 %v565
        %981 = vmatprep.subr.mxu0 %v569
        %982 = vmatpush1.msra.mxu0 %v568
        %983 = vmatprep.subr.mxu0 %v572
        %984 = vmatpush1.msra.mxu0 %v571
        %985 = vmatprep.subr.mxu0 %v575
        %986 = vmatpush1.msra.mxu0 %v574
        %987 = vmatprep.subr.mxu0 %v578
        %988 = vmatpush1.msra.mxu0 %v577
        %989 = vmatprep.subr.mxu0 %v581
        %990 = vmatpush1.msra.mxu0 %v580
        %991 = vmatprep.subr.mxu0 %v584
        %992 = vmatpush1.msra.mxu0 %v583
        %993 = vmatprep.subr.mxu0 %v587
        %994 = vmatpush1.msra.mxu0 %v586
        %995 = vmatprep.subr.mxu0 %v590
        %996 = vmatpush1.msra.mxu0 %v589
        %997 = vmatprep.subr.mxu0 %v593
        %998 = vmatpush1.msra.mxu0 %v592
        %999 = vmatprep.subr.mxu0 %v596
        %1000 = vmatpush1.msra.mxu0 %v595
        %1001 = vmatprep.subr.mxu0 %v599
        %1002 = vmatpush1.msra.mxu0 %v598
        %1003 = vmatprep.subr.mxu0 %v602
        %1004 = vmatpush1.msra.mxu0 %v601
        %1005 = vmatprep.subr.mxu0 %v605
        %1006 = vmatpush1.msra.mxu0 %v604
        %1007 = vmatprep.subr.mxu0 %v608
        %1008 = vmatpush1.msra.mxu0 %v607
        %1009 = vmatprep.subr.mxu0 %v611
        %1010 = vmatpush1.msra.mxu0 %v610
        %1011 = vmatprep.subr.mxu0 0.0
        %1012 = vmatpush1.msra.mxu0 0.0
        %1013 = vmatprep.subr.mxu0 0.0
        %1014 = vmatpush1.msra.mxu0 0.0
        %1015 = vmatprep.subr.mxu0 0.0
        %1016 = vmatpush1.msra.mxu0 0.0
        %1017 = vmatprep.subr.mxu0 0.0
        %1018 = vmatpush1.msra.mxu0 0.0
        %1019 = vmatprep.subr.mxu0 0.0
        %1020 = vmatpush1.msra.mxu0 0.0
        %1021 = vmatprep.subr.mxu0 0.0
        %1022 = vmatpush1.msra.mxu0 0.0
        %1023 = vmatprep.subr.mxu0 0.0
        %1024 = vmatpush1.msra.mxu0 0.0
        %1025 = vmatprep.subr.mxu0 0.0
        %1026 = vmatpush1.msra.mxu0 0.0
        %1027 = vmatprep.subr.mxu0 0.0
        %1028 = vmatpush1.msra.mxu0 0.0
        %1029 = vmatprep.subr.mxu0 0.0
        %1030 = vmatpush1.msra.mxu0 0.0
        %1031 = vmatprep.subr.mxu0 0.0
        %1032 = vmatpush1.msra.mxu0 0.0
        %1033 = vmatprep.subr.mxu0 0.0
        %1034 = vmatpush1.msra.mxu0 0.0
        %1035 = vmatprep.subr.mxu0 0.0
        %1036 = vmatpush1.msra.mxu0 0.0
        %1037 = vmatprep.subr.mxu0 0.0
        %1038 = vmatpush1.msra.mxu0 0.0
        %1039 = vmatprep.subr.mxu0 0.0
        %1040 = vmatpush1.msra.mxu0 0.0
        %1041 = vmatprep.subr.mxu0 0.0
        %1042 = vmatpush1.msra.mxu0 0.0
        %1043 = vmatprep.mubr.f32.mxu0 0.0
        %1044 = vmatmul.mubr.f32.gmra.mrb[0].mxu0 %v975
        %v1045 = vpop.f32.mrb[0].mxu0
        %v1046 = vadd.f32 0.0, %v1045
        %v1047 = vpop.f32.mrb[0].mxu0
        %v1048 = vadd.f32 0.0, %v1047
        %1049 = vdwg.mxu0
        %1050 = vmatprep.subr.mxu0 0.0
        %1051 = vmatpush1.msra.mxu0 %v567
        %1052 = vmatprep.subr.mxu0 0.0
        %1053 = vmatpush1.msra.mxu0 %v570
        %1054 = vmatprep.subr.mxu0 0.0
        %1055 = vmatpush1.msra.mxu0 %v573
        %1056 = vmatprep.subr.mxu0 0.0
        %1057 = vmatpush1.msra.mxu0 %v576
        %1058 = vmatprep.subr.mxu0 0.0
        %1059 = vmatpush1.msra.mxu0 %v579
        %1060 = vmatprep.subr.mxu0 0.0
        %1061 = vmatpush1.msra.mxu0 %v582
        %1062 = vmatprep.subr.mxu0 0.0
        %1063 = vmatpush1.msra.mxu0 %v585
        %1064 = vmatprep.subr.mxu0 0.0
        %1065 = vmatpush1.msra.mxu0 %v588
        %1066 = vmatprep.subr.mxu0 0.0
        %1067 = vmatpush1.msra.mxu0 %v591
        %1068 = vmatprep.subr.mxu0 0.0
        %1069 = vmatpush1.msra.mxu0 %v594
        %1070 = vmatprep.subr.mxu0 0.0
        %1071 = vmatpush1.msra.mxu0 %v597
        %1072 = vmatprep.subr.mxu0 0.0
        %1073 = vmatpush1.msra.mxu0 %v600
        %1074 = vmatprep.subr.mxu0 0.0
        %1075 = vmatpush1.msra.mxu0 %v603
        %1076 = vmatprep.subr.mxu0 0.0
        %1077 = vmatpush1.msra.mxu0 %v606
        %1078 = vmatprep.subr.mxu0 0.0
        %1079 = vmatpush1.msra.mxu0 %v609
        %1080 = vmatprep.subr.mxu0 0.0
        %1081 = vmatpush1.msra.mxu0 %v612
        %1082 = vmatprep.subr.mxu0 0.0
        %1083 = vmatpush1.msra.mxu0 0.0
        %1084 = vmatprep.subr.mxu0 0.0
        %1085 = vmatpush1.msra.mxu0 0.0
        %1086 = vmatprep.subr.mxu0 0.0
        %1087 = vmatpush1.msra.mxu0 0.0
        %1088 = vmatprep.subr.mxu0 0.0
        %1089 = vmatpush1.msra.mxu0 0.0
        %1090 = vmatprep.subr.mxu0 0.0
        %1091 = vmatpush1.msra.mxu0 0.0
        %1092 = vmatprep.subr.mxu0 0.0
        %1093 = vmatpush1.msra.mxu0 0.0
        %1094 = vmatprep.subr.mxu0 0.0
        %1095 = vmatpush1.msra.mxu0 0.0
        %1096 = vmatprep.subr.mxu0 0.0
        %1097 = vmatpush1.msra.mxu0 0.0
        %1098 = vmatprep.subr.mxu0 0.0
        %1099 = vmatpush1.msra.mxu0 0.0
        %1100 = vmatprep.subr.mxu0 0.0
        %1101 = vmatpush1.msra.mxu0 0.0
        %1102 = vmatprep.subr.mxu0 0.0
        %1103 = vmatpush1.msra.mxu0 0.0
        %1104 = vmatprep.subr.mxu0 0.0
        %1105 = vmatpush1.msra.mxu0 0.0
        %1106 = vmatprep.subr.mxu0 0.0
        %1107 = vmatpush1.msra.mxu0 0.0
        %1108 = vmatprep.subr.mxu0 0.0
        %1109 = vmatpush1.msra.mxu0 0.0
        %1110 = vmatprep.subr.mxu0 0.0
        %1111 = vmatpush1.msra.mxu0 0.0
        %1112 = vmatprep.subr.mxu0 0.0
        %1113 = vmatpush1.msra.mxu0 0.0
        %1114 = vmatprep.mubr.f32.mxu0 0.0
        %1115 = vmatmul.mubr.f32.gmra.mrb[0].mxu0 %v975
        %v1116 = vpop.f32.mrb[0].mxu0
        %v1117 = vadd.f32 0.0, %v1116
        %v1118 = vpop.f32.mrb[0].mxu0
        %1119 = vdwg.mxu0
        %v1122 = vcombine.low %v1046, %v1048
        %v1124 = vunpack.c.l.s4 1966171168
        %v1125 = vunpack.c.0.s8 %v1124
        %v1126 = vlaneseq
        %v1127 = vshrl.u32 %v1126, 7
        %v1128 = vsub.s32 %v1125, %v1127
        %v1129 = vrot.slane %v1122, %v1128
        %v1131 = vunpack.c.l.s4 1966171168
        %v1132 = vunpack.c.0.s8 %v1131
        %v1133 = vlaneseq
        %v1134 = vshrl.u32 %v1133, 7
        %v1135 = vsub.s32 %v1132, %v1134
        %v1136 = vrot.slane %v1129, %v1135
        %v1138 = vadd.f32 %v978, %v1136
        %v1139 = vxor.u32 %v1138, 2147483648
        %v1140 = vmul.f32 %v1139, 1.442695
        %v1141 = vpow.pop %v1140
        %v1142 = vadd.f32 %v1141, 1.0
        %v1143 = vrcp.pop %v1142
        %v1144 = vmul.f32 1.0, %v1143
        %v1145 = vadd.f32 %v1117, %v613
        %v1146 = vmul.f32 %v1144, %v1145
        %v1148 = vrot.slane %v978, 2
        %v1150 = vadd.f32 %v1148, %v1146
        %v1151 = vtanh.pop %v1150
        %v1152 = vsub.f32 %v975, %v1151
        %v1154 = vrot.slane %v1144, 1
        %v1156 = vmul.f32 %v1154, %v1152
        %v1157 = vadd.f32 %v1151, %v1156
        %1158 = vst [vmem:[#allocation2 + $0x2] sm:$0x1] %v1157
        %s1159 = scalar_lea.vmem [#allocation3], 3
        %v1160 = vld [vmem:[%s1159] ss:$8 sm:$0x7]
        %1161 = vmatprep.subr.mxu0 %v566
        %1162 = vmatpush1.msra.mxu0 %v565
        %1163 = vmatprep.subr.mxu0 %v569
        %1164 = vmatpush1.msra.mxu0 %v568
        %1165 = vmatprep.subr.mxu0 %v572
        %1166 = vmatpush1.msra.mxu0 %v571
        %1167 = vmatprep.subr.mxu0 %v575
        %1168 = vmatpush1.msra.mxu0 %v574
        %1169 = vmatprep.subr.mxu0 %v578
        %1170 = vmatpush1.msra.mxu0 %v577
        %1171 = vmatprep.subr.mxu0 %v581
        %1172 = vmatpush1.msra.mxu0 %v580
        %1173 = vmatprep.subr.mxu0 %v584
        %1174 = vmatpush1.msra.mxu0 %v583
        %1175 = vmatprep.subr.mxu0 %v587
        %1176 = vmatpush1.msra.mxu0 %v586
        %1177 = vmatprep.subr.mxu0 %v590
        %1178 = vmatpush1.msra.mxu0 %v589
        %1179 = vmatprep.subr.mxu0 %v593
        %1180 = vmatpush1.msra.mxu0 %v592
        %1181 = vmatprep.subr.mxu0 %v596
        %1182 = vmatpush1.msra.mxu0 %v595
        %1183 = vmatprep.subr.mxu0 %v599
        %1184 = vmatpush1.msra.mxu0 %v598
        %1185 = vmatprep.subr.mxu0 %v602
        %1186 = vmatpush1.msra.mxu0 %v601
        %1187 = vmatprep.subr.mxu0 %v605
        %1188 = vmatpush1.msra.mxu0 %v604
        %1189 = vmatprep.subr.mxu0 %v608
        %1190 = vmatpush1.msra.mxu0 %v607
        %1191 = vmatprep.subr.mxu0 %v611
        %1192 = vmatpush1.msra.mxu0 %v610
        %1193 = vmatprep.subr.mxu0 0.0
        %1194 = vmatpush1.msra.mxu0 0.0
        %1195 = vmatprep.subr.mxu0 0.0
        %1196 = vmatpush1.msra.mxu0 0.0
        %1197 = vmatprep.subr.mxu0 0.0
        %1198 = vmatpush1.msra.mxu0 0.0
        %1199 = vmatprep.subr.mxu0 0.0
        %1200 = vmatpush1.msra.mxu0 0.0
        %1201 = vmatprep.subr.mxu0 0.0
        %1202 = vmatpush1.msra.mxu0 0.0
        %1203 = vmatprep.subr.mxu0 0.0
        %1204 = vmatpush1.msra.mxu0 0.0
        %1205 = vmatprep.subr.mxu0 0.0
        %1206 = vmatpush1.msra.mxu0 0.0
        %1207 = vmatprep.subr.mxu0 0.0
        %1208 = vmatpush1.msra.mxu0 0.0
        %1209 = vmatprep.subr.mxu0 0.0
        %1210 = vmatpush1.msra.mxu0 0.0
        %1211 = vmatprep.subr.mxu0 0.0
        %1212 = vmatpush1.msra.mxu0 0.0
        %1213 = vmatprep.subr.mxu0 0.0
        %1214 = vmatpush1.msra.mxu0 0.0
        %1215 = vmatprep.subr.mxu0 0.0
        %1216 = vmatpush1.msra.mxu0 0.0
        %1217 = vmatprep.subr.mxu0 0.0
        %1218 = vmatpush1.msra.mxu0 0.0
        %1219 = vmatprep.subr.mxu0 0.0
        %1220 = vmatpush1.msra.mxu0 0.0
        %1221 = vmatprep.subr.mxu0 0.0
        %1222 = vmatpush1.msra.mxu0 0.0
        %1223 = vmatprep.subr.mxu0 0.0
        %1224 = vmatpush1.msra.mxu0 0.0
        %1225 = vmatprep.mubr.f32.mxu0 0.0
        %1226 = vmatmul.mubr.f32.gmra.mrb[0].mxu0 %v1157
        %v1227 = vpop.f32.mrb[0].mxu0
        %v1228 = vadd.f32 0.0, %v1227
        %v1229 = vpop.f32.mrb[0].mxu0
        %v1230 = vadd.f32 0.0, %v1229
        %1231 = vdwg.mxu0
        %1232 = vmatprep.subr.mxu0 0.0
        %1233 = vmatpush1.msra.mxu0 %v567
        %1234 = vmatprep.subr.mxu0 0.0
        %1235 = vmatpush1.msra.mxu0 %v570
        %1236 = vmatprep.subr.mxu0 0.0
        %1237 = vmatpush1.msra.mxu0 %v573
        %1238 = vmatprep.subr.mxu0 0.0
        %1239 = vmatpush1.msra.mxu0 %v576
        %1240 = vmatprep.subr.mxu0 0.0
        %1241 = vmatpush1.msra.mxu0 %v579
        %1242 = vmatprep.subr.mxu0 0.0
        %1243 = vmatpush1.msra.mxu0 %v582
        %1244 = vmatprep.subr.mxu0 0.0
        %1245 = vmatpush1.msra.mxu0 %v585
        %1246 = vmatprep.subr.mxu0 0.0
        %1247 = vmatpush1.msra.mxu0 %v588
        %1248 = vmatprep.subr.mxu0 0.0
        %1249 = vmatpush1.msra.mxu0 %v591
        %1250 = vmatprep.subr.mxu0 0.0
        %1251 = vmatpush1.msra.mxu0 %v594
        %1252 = vmatprep.subr.mxu0 0.0
        %1253 = vmatpush1.msra.mxu0 %v597
        %1254 = vmatprep.subr.mxu0 0.0
        %1255 = vmatpush1.msra.mxu0 %v600
        %1256 = vmatprep.subr.mxu0 0.0
        %1257 = vmatpush1.msra.mxu0 %v603
        %1258 = vmatprep.subr.mxu0 0.0
        %1259 = vmatpush1.msra.mxu0 %v606
        %1260 = vmatprep.subr.mxu0 0.0
        %1261 = vmatpush1.msra.mxu0 %v609
        %1262 = vmatprep.subr.mxu0 0.0
        %1263 = vmatpush1.msra.mxu0 %v612
        %1264 = vmatprep.subr.mxu0 0.0
        %1265 = vmatpush1.msra.mxu0 0.0
        %1266 = vmatprep.subr.mxu0 0.0
        %1267 = vmatpush1.msra.mxu0 0.0
        %1268 = vmatprep.subr.mxu0 0.0
        %1269 = vmatpush1.msra.mxu0 0.0
        %1270 = vmatprep.subr.mxu0 0.0
        %1271 = vmatpush1.msra.mxu0 0.0
        %1272 = vmatprep.subr.mxu0 0.0
        %1273 = vmatpush1.msra.mxu0 0.0
        %1274 = vmatprep.subr.mxu0 0.0
        %1275 = vmatpush1.msra.mxu0 0.0
        %1276 = vmatprep.subr.mxu0 0.0
        %1277 = vmatpush1.msra.mxu0 0.0
        %1278 = vmatprep.subr.mxu0 0.0
        %1279 = vmatpush1.msra.mxu0 0.0
        %1280 = vmatprep.subr.mxu0 0.0
        %1281 = vmatpush1.msra.mxu0 0.0
        %1282 = vmatprep.subr.mxu0 0.0
        %1283 = vmatpush1.msra.mxu0 0.0
        %1284 = vmatprep.subr.mxu0 0.0
        %1285 = vmatpush1.msra.mxu0 0.0
        %1286 = vmatprep.subr.mxu0 0.0
        %1287 = vmatpush1.msra.mxu0 0.0
        %1288 = vmatprep.subr.mxu0 0.0
        %1289 = vmatpush1.msra.mxu0 0.0
        %1290 = vmatprep.subr.mxu0 0.0
        %1291 = vmatpush1.msra.mxu0 0.0
        %1292 = vmatprep.subr.mxu0 0.0
        %1293 = vmatpush1.msra.mxu0 0.0
        %1294 = vmatprep.subr.mxu0 0.0
        %1295 = vmatpush1.msra.mxu0 0.0
        %1296 = vmatprep.mubr.f32.mxu0 0.0
        %1297 = vmatmul.mubr.f32.gmra.mrb[0].mxu0 %v1157
        %v1298 = vpop.f32.mrb[0].mxu0
        %v1299 = vadd.f32 0.0, %v1298
        %v1300 = vpop.f32.mrb[0].mxu0
        %1301 = vdwg.mxu0
        %v1304 = vcombine.low %v1228, %v1230
        %v1306 = vunpack.c.l.s4 1966171168
        %v1307 = vunpack.c.0.s8 %v1306
        %v1308 = vlaneseq
        %v1309 = vshrl.u32 %v1308, 7
        %v1310 = vsub.s32 %v1307, %v1309
        %v1311 = vrot.slane %v1304, %v1310
        %v1313 = vunpack.c.l.s4 1966171168
        %v1314 = vunpack.c.0.s8 %v1313
        %v1315 = vlaneseq
        %v1316 = vshrl.u32 %v1315, 7
        %v1317 = vsub.s32 %v1314, %v1316
        %v1318 = vrot.slane %v1311, %v1317
        %v1320 = vadd.f32 %v1160, %v1318
        %v1321 = vxor.u32 %v1320, 2147483648
        %v1322 = vmul.f32 %v1321, 1.442695
        %v1323 = vpow.pop %v1322
        %v1324 = vadd.f32 %v1323, 1.0
        %v1325 = vrcp.pop %v1324
        %v1326 = vmul.f32 1.0, %v1325
        %v1327 = vadd.f32 %v1299, %v613
        %v1328 = vmul.f32 %v1326, %v1327
        %v1330 = vrot.slane %v1160, 2
        %v1332 = vadd.f32 %v1330, %v1328
        %v1333 = vtanh.pop %v1332
        %v1334 = vsub.f32 %v1157, %v1333
        %v1336 = vrot.slane %v1326, 1
        %v1338 = vmul.f32 %v1336, %v1334
        %v1339 = vadd.f32 %v1333, %v1338
        %1340 = vst [vmem:[#allocation2 + $0x3] sm:$0x1] %v1339
        %s1341 = scalar_lea.vmem [#allocation3], 4
        %v1342 = vld [vmem:[%s1341] ss:$8 sm:$0x7]
        %1343 = vmatprep.subr.mxu0 %v566
        %1344 = vmatpush1.msra.mxu0 %v565
        %1345 = vmatprep.subr.mxu0 %v569
        %1346 = vmatpush1.msra.mxu0 %v568
        %1347 = vmatprep.subr.mxu0 %v572
        %1348 = vmatpush1.msra.mxu0 %v571
        %1349 = vmatprep.subr.mxu0 %v575
        %1350 = vmatpush1.msra.mxu0 %v574
        %1351 = vmatprep.subr.mxu0 %v578
        %1352 = vmatpush1.msra.mxu0 %v577
        %1353 = vmatprep.subr.mxu0 %v581
        %1354 = vmatpush1.msra.mxu0 %v580
        %1355 = vmatprep.subr.mxu0 %v584
        %1356 = vmatpush1.msra.mxu0 %v583
        %1357 = vmatprep.subr.mxu0 %v587
        %1358 = vmatpush1.msra.mxu0 %v586
        %1359 = vmatprep.subr.mxu0 %v590
        %1360 = vmatpush1.msra.mxu0 %v589
        %1361 = vmatprep.subr.mxu0 %v593
        %1362 = vmatpush1.msra.mxu0 %v592
        %1363 = vmatprep.subr.mxu0 %v596
        %1364 = vmatpush1.msra.mxu0 %v595
        %1365 = vmatprep.subr.mxu0 %v599
        %1366 = vmatpush1.msra.mxu0 %v598
        %1367 = vmatprep.subr.mxu0 %v602
        %1368 = vmatpush1.msra.mxu0 %v601
        %1369 = vmatprep.subr.mxu0 %v605
        %1370 = vmatpush1.msra.mxu0 %v604
        %1371 = vmatprep.subr.mxu0 %v608
        %1372 = vmatpush1.msra.mxu0 %v607
        %1373 = vmatprep.subr.mxu0 %v611
        %1374 = vmatpush1.msra.mxu0 %v610
        %1375 = vmatprep.subr.mxu0 0.0
        %1376 = vmatpush1.msra.mxu0 0.0
        %1377 = vmatprep.subr.mxu0 0.0
        %1378 = vmatpush1.msra.mxu0 0.0
        %1379 = vmatprep.subr.mxu0 0.0
        %1380 = vmatpush1.msra.mxu0 0.0
        %1381 = vmatprep.subr.mxu0 0.0
        %1382 = vmatpush1.msra.mxu0 0.0
        %1383 = vmatprep.subr.mxu0 0.0
        %1384 = vmatpush1.msra.mxu0 0.0
        %1385 = vmatprep.subr.mxu0 0.0
        %1386 = vmatpush1.msra.mxu0 0.0
        %1387 = vmatprep.subr.mxu0 0.0
        %1388 = vmatpush1.msra.mxu0 0.0
        %1389 = vmatprep.subr.mxu0 0.0
        %1390 = vmatpush1.msra.mxu0 0.0
        %1391 = vmatprep.subr.mxu0 0.0
        %1392 = vmatpush1.msra.mxu0 0.0
        %1393 = vmatprep.subr.mxu0 0.0
        %1394 = vmatpush1.msra.mxu0 0.0
        %1395 = vmatprep.subr.mxu0 0.0
        %1396 = vmatpush1.msra.mxu0 0.0
        %1397 = vmatprep.subr.mxu0 0.0
        %1398 = vmatpush1.msra.mxu0 0.0
        %1399 = vmatprep.subr.mxu0 0.0
        %1400 = vmatpush1.msra.mxu0 0.0
        %1401 = vmatprep.subr.mxu0 0.0
        %1402 = vmatpush1.msra.mxu0 0.0
        %1403 = vmatprep.subr.mxu0 0.0
        %1404 = vmatpush1.msra.mxu0 0.0
        %1405 = vmatprep.subr.mxu0 0.0
        %1406 = vmatpush1.msra.mxu0 0.0
        %1407 = vmatprep.mubr.f32.mxu0 0.0
        %1408 = vmatmul.mubr.f32.gmra.mrb[0].mxu0 %v1339
        %v1409 = vpop.f32.mrb[0].mxu0
        %v1410 = vadd.f32 0.0, %v1409
        %v1411 = vpop.f32.mrb[0].mxu0
        %v1412 = vadd.f32 0.0, %v1411
        %1413 = vdwg.mxu0
        %1414 = vmatprep.subr.mxu0 0.0
        %1415 = vmatpush1.msra.mxu0 %v567
        %1416 = vmatprep.subr.mxu0 0.0
        %1417 = vmatpush1.msra.mxu0 %v570
        %1418 = vmatprep.subr.mxu0 0.0
        %1419 = vmatpush1.msra.mxu0 %v573
        %1420 = vmatprep.subr.mxu0 0.0
        %1421 = vmatpush1.msra.mxu0 %v576
        %1422 = vmatprep.subr.mxu0 0.0
        %1423 = vmatpush1.msra.mxu0 %v579
        %1424 = vmatprep.subr.mxu0 0.0
        %1425 = vmatpush1.msra.mxu0 %v582
        %1426 = vmatprep.subr.mxu0 0.0
        %1427 = vmatpush1.msra.mxu0 %v585
        %1428 = vmatprep.subr.mxu0 0.0
        %1429 = vmatpush1.msra.mxu0 %v588
        %1430 = vmatprep.subr.mxu0 0.0
        %1431 = vmatpush1.msra.mxu0 %v591
        %1432 = vmatprep.subr.mxu0 0.0
        %1433 = vmatpush1.msra.mxu0 %v594
        %1434 = vmatprep.subr.mxu0 0.0
        %1435 = vmatpush1.msra.mxu0 %v597
        %1436 = vmatprep.subr.mxu0 0.0
        %1437 = vmatpush1.msra.mxu0 %v600
        %1438 = vmatprep.subr.mxu0 0.0
        %1439 = vmatpush1.msra.mxu0 %v603
        %1440 = vmatprep.subr.mxu0 0.0
        %1441 = vmatpush1.msra.mxu0 %v606
        %1442 = vmatprep.subr.mxu0 0.0
        %1443 = vmatpush1.msra.mxu0 %v609
        %1444 = vmatprep.subr.mxu0 0.0
        %1445 = vmatpush1.msra.mxu0 %v612
        %1446 = vmatprep.subr.mxu0 0.0
        %1447 = vmatpush1.msra.mxu0 0.0
        %1448 = vmatprep.subr.mxu0 0.0
        %1449 = vmatpush1.msra.mxu0 0.0
        %1450 = vmatprep.subr.mxu0 0.0
        %1451 = vmatpush1.msra.mxu0 0.0
        %1452 = vmatprep.subr.mxu0 0.0
        %1453 = vmatpush1.msra.mxu0 0.0
        %1454 = vmatprep.subr.mxu0 0.0
        %1455 = vmatpush1.msra.mxu0 0.0
        %1456 = vmatprep.subr.mxu0 0.0
        %1457 = vmatpush1.msra.mxu0 0.0
        %1458 = vmatprep.subr.mxu0 0.0
        %1459 = vmatpush1.msra.mxu0 0.0
        %1460 = vmatprep.subr.mxu0 0.0
        %1461 = vmatpush1.msra.mxu0 0.0
        %1462 = vmatprep.subr.mxu0 0.0
        %1463 = vmatpush1.msra.mxu0 0.0
        %1464 = vmatprep.subr.mxu0 0.0
        %1465 = vmatpush1.msra.mxu0 0.0
        %1466 = vmatprep.subr.mxu0 0.0
        %1467 = vmatpush1.msra.mxu0 0.0
        %1468 = vmatprep.subr.mxu0 0.0
        %1469 = vmatpush1.msra.mxu0 0.0
        %1470 = vmatprep.subr.mxu0 0.0
        %1471 = vmatpush1.msra.mxu0 0.0
        %1472 = vmatprep.subr.mxu0 0.0
        %1473 = vmatpush1.msra.mxu0 0.0
        %1474 = vmatprep.subr.mxu0 0.0
        %1475 = vmatpush1.msra.mxu0 0.0
        %1476 = vmatprep.subr.mxu0 0.0
        %1477 = vmatpush1.msra.mxu0 0.0
        %1478 = vmatprep.mubr.f32.mxu0 0.0
        %1479 = vmatmul.mubr.f32.gmra.mrb[0].mxu0 %v1339
        %v1480 = vpop.f32.mrb[0].mxu0
        %v1481 = vadd.f32 0.0, %v1480
        %v1482 = vpop.f32.mrb[0].mxu0
        %1483 = vdwg.mxu0
        %v1486 = vcombine.low %v1410, %v1412
        %v1488 = vunpack.c.l.s4 1966171168
        %v1489 = vunpack.c.0.s8 %v1488
        %v1490 = vlaneseq
        %v1491 = vshrl.u32 %v1490, 7
        %v1492 = vsub.s32 %v1489, %v1491
        %v1493 = vrot.slane %v1486, %v1492
        %v1495 = vunpack.c.l.s4 1966171168
        %v1496 = vunpack.c.0.s8 %v1495
        %v1497 = vlaneseq
        %v1498 = vshrl.u32 %v1497, 7
        %v1499 = vsub.s32 %v1496, %v1498
        %v1500 = vrot.slane %v1493, %v1499
        %v1502 = vadd.f32 %v1342, %v1500
        %v1503 = vxor.u32 %v1502, 2147483648
        %v1504 = vmul.f32 %v1503, 1.442695
        %v1505 = vpow.pop %v1504
        %v1506 = vadd.f32 %v1505, 1.0
        %v1507 = vrcp.pop %v1506
        %v1508 = vmul.f32 1.0, %v1507
        %v1509 = vadd.f32 %v1481, %v613
        %v1510 = vmul.f32 %v1508, %v1509
        %v1512 = vrot.slane %v1342, 2
        %v1514 = vadd.f32 %v1512, %v1510
        %v1515 = vtanh.pop %v1514
        %v1516 = vsub.f32 %v1339, %v1515
        %v1518 = vrot.slane %v1508, 1
        %v1520 = vmul.f32 %v1518, %v1516
        %v1521 = vadd.f32 %v1515, %v1520
        %1522 = vst [vmem:[#allocation2 + $0x4] sm:$0x1] %v1521
        %s1523 = scalar_lea.vmem [#allocation3], 5
        %v1524 = vld [vmem:[%s1523] ss:$8 sm:$0x7]
        %1525 = vmatprep.subr.mxu0 %v566
        %1526 = vmatpush1.msra.mxu0 %v565
        %1527 = vmatprep.subr.mxu0 %v569
        %1528 = vmatpush1.msra.mxu0 %v568
        %1529 = vmatprep.subr.mxu0 %v572
        %1530 = vmatpush1.msra.mxu0 %v571
        %1531 = vmatprep.subr.mxu0 %v575
        %1532 = vmatpush1.msra.mxu0 %v574
        %1533 = vmatprep.subr.mxu0 %v578
        %1534 = vmatpush1.msra.mxu0 %v577
        %1535 = vmatprep.subr.mxu0 %v581
        %1536 = vmatpush1.msra.mxu0 %v580
        %1537 = vmatprep.subr.mxu0 %v584
        %1538 = vmatpush1.msra.mxu0 %v583
        %1539 = vmatprep.subr.mxu0 %v587
        %1540 = vmatpush1.msra.mxu0 %v586
        %1541 = vmatprep.subr.mxu0 %v590
        %1542 = vmatpush1.msra.mxu0 %v589
        %1543 = vmatprep.subr.mxu0 %v593
        %1544 = vmatpush1.msra.mxu0 %v592
        %1545 = vmatprep.subr.mxu0 %v596
        %1546 = vmatpush1.msra.mxu0 %v595
        %1547 = vmatprep.subr.mxu0 %v599
        %1548 = vmatpush1.msra.mxu0 %v598
        %1549 = vmatprep.subr.mxu0 %v602
        %1550 = vmatpush1.msra.mxu0 %v601
        %1551 = vmatprep.subr.mxu0 %v605
        %1552 = vmatpush1.msra.mxu0 %v604
        %1553 = vmatprep.subr.mxu0 %v608
        %1554 = vmatpush1.msra.mxu0 %v607
        %1555 = vmatprep.subr.mxu0 %v611
        %1556 = vmatpush1.msra.mxu0 %v610
        %1557 = vmatprep.subr.mxu0 0.0
        %1558 = vmatpush1.msra.mxu0 0.0
        %1559 = vmatprep.subr.mxu0 0.0
        %1560 = vmatpush1.msra.mxu0 0.0
        %1561 = vmatprep.subr.mxu0 0.0
        %1562 = vmatpush1.msra.mxu0 0.0
        %1563 = vmatprep.subr.mxu0 0.0
        %1564 = vmatpush1.msra.mxu0 0.0
        %1565 = vmatprep.subr.mxu0 0.0
        %1566 = vmatpush1.msra.mxu0 0.0
        %1567 = vmatprep.subr.mxu0 0.0
        %1568 = vmatpush1.msra.mxu0 0.0
        %1569 = vmatprep.subr.mxu0 0.0
        %1570 = vmatpush1.msra.mxu0 0.0
        %1571 = vmatprep.subr.mxu0 0.0
        %1572 = vmatpush1.msra.mxu0 0.0
        %1573 = vmatprep.subr.mxu0 0.0
        %1574 = vmatpush1.msra.mxu0 0.0
        %1575 = vmatprep.subr.mxu0 0.0
        %1576 = vmatpush1.msra.mxu0 0.0
        %1577 = vmatprep.subr.mxu0 0.0
        %1578 = vmatpush1.msra.mxu0 0.0
        %1579 = vmatprep.subr.mxu0 0.0
        %1580 = vmatpush1.msra.mxu0 0.0
        %1581 = vmatprep.subr.mxu0 0.0
        %1582 = vmatpush1.msra.mxu0 0.0
        %1583 = vmatprep.subr.mxu0 0.0
        %1584 = vmatpush1.msra.mxu0 0.0
        %1585 = vmatprep.subr.mxu0 0.0
        %1586 = vmatpush1.msra.mxu0 0.0
        %1587 = vmatprep.subr.mxu0 0.0
        %1588 = vmatpush1.msra.mxu0 0.0
        %1589 = vmatprep.mubr.f32.mxu0 0.0
        %1590 = vmatmul.mubr.f32.gmra.mrb[0].mxu0 %v1521
        %v1591 = vpop.f32.mrb[0].mxu0
        %v1592 = vadd.f32 0.0, %v1591
        %v1593 = vpop.f32.mrb[0].mxu0
        %v1594 = vadd.f32 0.0, %v1593
        %1595 = vdwg.mxu0
        %1596 = vmatprep.subr.mxu0 0.0
        %1597 = vmatpush1.msra.mxu0 %v567
        %1598 = vmatprep.subr.mxu0 0.0
        %1599 = vmatpush1.msra.mxu0 %v570
        %1600 = vmatprep.subr.mxu0 0.0
        %1601 = vmatpush1.msra.mxu0 %v573
        %1602 = vmatprep.subr.mxu0 0.0
        %1603 = vmatpush1.msra.mxu0 %v576
        %1604 = vmatprep.subr.mxu0 0.0
        %1605 = vmatpush1.msra.mxu0 %v579
        %1606 = vmatprep.subr.mxu0 0.0
        %1607 = vmatpush1.msra.mxu0 %v582
        %1608 = vmatprep.subr.mxu0 0.0
        %1609 = vmatpush1.msra.mxu0 %v585
        %1610 = vmatprep.subr.mxu0 0.0
        %1611 = vmatpush1.msra.mxu0 %v588
        %1612 = vmatprep.subr.mxu0 0.0
        %1613 = vmatpush1.msra.mxu0 %v591
        %1614 = vmatprep.subr.mxu0 0.0
        %1615 = vmatpush1.msra.mxu0 %v594
        %1616 = vmatprep.subr.mxu0 0.0
        %1617 = vmatpush1.msra.mxu0 %v597
        %1618 = vmatprep.subr.mxu0 0.0
        %1619 = vmatpush1.msra.mxu0 %v600
        %1620 = vmatprep.subr.mxu0 0.0
        %1621 = vmatpush1.msra.mxu0 %v603
        %1622 = vmatprep.subr.mxu0 0.0
        %1623 = vmatpush1.msra.mxu0 %v606
        %1624 = vmatprep.subr.mxu0 0.0
        %1625 = vmatpush1.msra.mxu0 %v609
        %1626 = vmatprep.subr.mxu0 0.0
        %1627 = vmatpush1.msra.mxu0 %v612
        %1628 = vmatprep.subr.mxu0 0.0
        %1629 = vmatpush1.msra.mxu0 0.0
        %1630 = vmatprep.subr.mxu0 0.0
        %1631 = vmatpush1.msra.mxu0 0.0
        %1632 = vmatprep.subr.mxu0 0.0
        %1633 = vmatpush1.msra.mxu0 0.0
        %1634 = vmatprep.subr.mxu0 0.0
        %1635 = vmatpush1.msra.mxu0 0.0
        %1636 = vmatprep.subr.mxu0 0.0
        %1637 = vmatpush1.msra.mxu0 0.0
        %1638 = vmatprep.subr.mxu0 0.0
        %1639 = vmatpush1.msra.mxu0 0.0
        %1640 = vmatprep.subr.mxu0 0.0
        %1641 = vmatpush1.msra.mxu0 0.0
        %1642 = vmatprep.subr.mxu0 0.0
        %1643 = vmatpush1.msra.mxu0 0.0
        %1644 = vmatprep.subr.mxu0 0.0
        %1645 = vmatpush1.msra.mxu0 0.0
        %1646 = vmatprep.subr.mxu0 0.0
        %1647 = vmatpush1.msra.mxu0 0.0
        %1648 = vmatprep.subr.mxu0 0.0
        %1649 = vmatpush1.msra.mxu0 0.0
        %1650 = vmatprep.subr.mxu0 0.0
        %1651 = vmatpush1.msra.mxu0 0.0
        %1652 = vmatprep.subr.mxu0 0.0
        %1653 = vmatpush1.msra.mxu0 0.0
        %1654 = vmatprep.subr.mxu0 0.0
        %1655 = vmatpush1.msra.mxu0 0.0
        %1656 = vmatprep.subr.mxu0 0.0
        %1657 = vmatpush1.msra.mxu0 0.0
        %1658 = vmatprep.subr.mxu0 0.0
        %1659 = vmatpush1.msra.mxu0 0.0
        %1660 = vmatprep.mubr.f32.mxu0 0.0
        %1661 = vmatmul.mubr.f32.gmra.mrb[0].mxu0 %v1521
        %v1662 = vpop.f32.mrb[0].mxu0
        %v1663 = vadd.f32 0.0, %v1662
        %v1664 = vpop.f32.mrb[0].mxu0
        %1665 = vdwg.mxu0
        %v1668 = vcombine.low %v1592, %v1594
        %v1670 = vunpack.c.l.s4 1966171168
        %v1671 = vunpack.c.0.s8 %v1670
        %v1672 = vlaneseq
        %v1673 = vshrl.u32 %v1672, 7
        %v1674 = vsub.s32 %v1671, %v1673
        %v1675 = vrot.slane %v1668, %v1674
        %v1677 = vunpack.c.l.s4 1966171168
        %v1678 = vunpack.c.0.s8 %v1677
        %v1679 = vlaneseq
        %v1680 = vshrl.u32 %v1679, 7
        %v1681 = vsub.s32 %v1678, %v1680
        %v1682 = vrot.slane %v1675, %v1681
        %v1684 = vadd.f32 %v1524, %v1682
        %v1685 = vxor.u32 %v1684, 2147483648
        %v1686 = vmul.f32 %v1685, 1.442695
        %v1687 = vpow.pop %v1686
        %v1688 = vadd.f32 %v1687, 1.0
        %v1689 = vrcp.pop %v1688
        %v1690 = vmul.f32 1.0, %v1689
        %v1691 = vadd.f32 %v1663, %v613
        %v1692 = vmul.f32 %v1690, %v1691
        %v1694 = vrot.slane %v1524, 2
        %v1696 = vadd.f32 %v1694, %v1692
        %v1697 = vtanh.pop %v1696
        %v1698 = vsub.f32 %v1521, %v1697
        %v1700 = vrot.slane %v1690, 1
        %v1702 = vmul.f32 %v1700, %v1698
        %v1703 = vadd.f32 %v1697, %v1702
        %1704 = vst [vmem:[#allocation2 + $0x5] sm:$0x1] %v1703
        %s1705 = scalar_lea.vmem [#allocation3], 6
        %v1706 = vld [vmem:[%s1705] ss:$8 sm:$0x7]
        %1707 = vmatprep.subr.mxu0 %v566
        %1708 = vmatpush1.msra.mxu0 %v565
        %1709 = vmatprep.subr.mxu0 %v569
        %1710 = vmatpush1.msra.mxu0 %v568
        %1711 = vmatprep.subr.mxu0 %v572
        %1712 = vmatpush1.msra.mxu0 %v571
        %1713 = vmatprep.subr.mxu0 %v575
        %1714 = vmatpush1.msra.mxu0 %v574
        %1715 = vmatprep.subr.mxu0 %v578
        %1716 = vmatpush1.msra.mxu0 %v577
        %1717 = vmatprep.subr.mxu0 %v581
        %1718 = vmatpush1.msra.mxu0 %v580
        %1719 = vmatprep.subr.mxu0 %v584
        %1720 = vmatpush1.msra.mxu0 %v583
        %1721 = vmatprep.subr.mxu0 %v587
        %1722 = vmatpush1.msra.mxu0 %v586
        %1723 = vmatprep.subr.mxu0 %v590
        %1724 = vmatpush1.msra.mxu0 %v589
        %1725 = vmatprep.subr.mxu0 %v593
        %1726 = vmatpush1.msra.mxu0 %v592
        %1727 = vmatprep.subr.mxu0 %v596
        %1728 = vmatpush1.msra.mxu0 %v595
        %1729 = vmatprep.subr.mxu0 %v599
        %1730 = vmatpush1.msra.mxu0 %v598
        %1731 = vmatprep.subr.mxu0 %v602
        %1732 = vmatpush1.msra.mxu0 %v601
        %1733 = vmatprep.subr.mxu0 %v605
        %1734 = vmatpush1.msra.mxu0 %v604
        %1735 = vmatprep.subr.mxu0 %v608
        %1736 = vmatpush1.msra.mxu0 %v607
        %1737 = vmatprep.subr.mxu0 %v611
        %1738 = vmatpush1.msra.mxu0 %v610
        %1739 = vmatprep.subr.mxu0 0.0
        %1740 = vmatpush1.msra.mxu0 0.0
        %1741 = vmatprep.subr.mxu0 0.0
        %1742 = vmatpush1.msra.mxu0 0.0
        %1743 = vmatprep.subr.mxu0 0.0
        %1744 = vmatpush1.msra.mxu0 0.0
        %1745 = vmatprep.subr.mxu0 0.0
        %1746 = vmatpush1.msra.mxu0 0.0
        %1747 = vmatprep.subr.mxu0 0.0
        %1748 = vmatpush1.msra.mxu0 0.0
        %1749 = vmatprep.subr.mxu0 0.0
        %1750 = vmatpush1.msra.mxu0 0.0
        %1751 = vmatprep.subr.mxu0 0.0
        %1752 = vmatpush1.msra.mxu0 0.0
        %1753 = vmatprep.subr.mxu0 0.0
        %1754 = vmatpush1.msra.mxu0 0.0
        %1755 = vmatprep.subr.mxu0 0.0
        %1756 = vmatpush1.msra.mxu0 0.0
        %1757 = vmatprep.subr.mxu0 0.0
        %1758 = vmatpush1.msra.mxu0 0.0
        %1759 = vmatprep.subr.mxu0 0.0
        %1760 = vmatpush1.msra.mxu0 0.0
        %1761 = vmatprep.subr.mxu0 0.0
        %1762 = vmatpush1.msra.mxu0 0.0
        %1763 = vmatprep.subr.mxu0 0.0
        %1764 = vmatpush1.msra.mxu0 0.0
        %1765 = vmatprep.subr.mxu0 0.0
        %1766 = vmatpush1.msra.mxu0 0.0
        %1767 = vmatprep.subr.mxu0 0.0
        %1768 = vmatpush1.msra.mxu0 0.0
        %1769 = vmatprep.subr.mxu0 0.0
        %1770 = vmatpush1.msra.mxu0 0.0
        %1771 = vmatprep.mubr.f32.mxu0 0.0
        %1772 = vmatmul.mubr.f32.gmra.mrb[0].mxu0 %v1703
        %v1773 = vpop.f32.mrb[0].mxu0
        %v1774 = vadd.f32 0.0, %v1773
        %v1775 = vpop.f32.mrb[0].mxu0
        %v1776 = vadd.f32 0.0, %v1775
        %1777 = vdwg.mxu0
        %1778 = vmatprep.subr.mxu0 0.0
        %1779 = vmatpush1.msra.mxu0 %v567
        %1780 = vmatprep.subr.mxu0 0.0
        %1781 = vmatpush1.msra.mxu0 %v570
        %1782 = vmatprep.subr.mxu0 0.0
        %1783 = vmatpush1.msra.mxu0 %v573
        %1784 = vmatprep.subr.mxu0 0.0
        %1785 = vmatpush1.msra.mxu0 %v576
        %1786 = vmatprep.subr.mxu0 0.0
        %1787 = vmatpush1.msra.mxu0 %v579
        %1788 = vmatprep.subr.mxu0 0.0
        %1789 = vmatpush1.msra.mxu0 %v582
        %1790 = vmatprep.subr.mxu0 0.0
        %1791 = vmatpush1.msra.mxu0 %v585
        %1792 = vmatprep.subr.mxu0 0.0
        %1793 = vmatpush1.msra.mxu0 %v588
        %1794 = vmatprep.subr.mxu0 0.0
        %1795 = vmatpush1.msra.mxu0 %v591
        %1796 = vmatprep.subr.mxu0 0.0
        %1797 = vmatpush1.msra.mxu0 %v594
        %1798 = vmatprep.subr.mxu0 0.0
        %1799 = vmatpush1.msra.mxu0 %v597
        %1800 = vmatprep.subr.mxu0 0.0
        %1801 = vmatpush1.msra.mxu0 %v600
        %1802 = vmatprep.subr.mxu0 0.0
        %1803 = vmatpush1.msra.mxu0 %v603
        %1804 = vmatprep.subr.mxu0 0.0
        %1805 = vmatpush1.msra.mxu0 %v606
        %1806 = vmatprep.subr.mxu0 0.0
        %1807 = vmatpush1.msra.mxu0 %v609
        %1808 = vmatprep.subr.mxu0 0.0
        %1809 = vmatpush1.msra.mxu0 %v612
        %1810 = vmatprep.subr.mxu0 0.0
        %1811 = vmatpush1.msra.mxu0 0.0
        %1812 = vmatprep.subr.mxu0 0.0
        %1813 = vmatpush1.msra.mxu0 0.0
        %1814 = vmatprep.subr.mxu0 0.0
        %1815 = vmatpush1.msra.mxu0 0.0
        %1816 = vmatprep.subr.mxu0 0.0
        %1817 = vmatpush1.msra.mxu0 0.0
        %1818 = vmatprep.subr.mxu0 0.0
        %1819 = vmatpush1.msra.mxu0 0.0
        %1820 = vmatprep.subr.mxu0 0.0
        %1821 = vmatpush1.msra.mxu0 0.0
        %1822 = vmatprep.subr.mxu0 0.0
        %1823 = vmatpush1.msra.mxu0 0.0
        %1824 = vmatprep.subr.mxu0 0.0
        %1825 = vmatpush1.msra.mxu0 0.0
        %1826 = vmatprep.subr.mxu0 0.0
        %1827 = vmatpush1.msra.mxu0 0.0
        %1828 = vmatprep.subr.mxu0 0.0
        %1829 = vmatpush1.msra.mxu0 0.0
        %1830 = vmatprep.subr.mxu0 0.0
        %1831 = vmatpush1.msra.mxu0 0.0
        %1832 = vmatprep.subr.mxu0 0.0
        %1833 = vmatpush1.msra.mxu0 0.0
        %1834 = vmatprep.subr.mxu0 0.0
        %1835 = vmatpush1.msra.mxu0 0.0
        %1836 = vmatprep.subr.mxu0 0.0
        %1837 = vmatpush1.msra.mxu0 0.0
        %1838 = vmatprep.subr.mxu0 0.0
        %1839 = vmatpush1.msra.mxu0 0.0
        %1840 = vmatprep.subr.mxu0 0.0
        %1841 = vmatpush1.msra.mxu0 0.0
        %1842 = vmatprep.mubr.f32.mxu0 0.0
        %1843 = vmatmul.mubr.f32.gmra.mrb[0].mxu0 %v1703
        %v1844 = vpop.f32.mrb[0].mxu0
        %v1845 = vadd.f32 0.0, %v1844
        %v1846 = vpop.f32.mrb[0].mxu0
        %1847 = vdwg.mxu0
        %v1850 = vcombine.low %v1774, %v1776
        %v1852 = vunpack.c.l.s4 1966171168
        %v1853 = vunpack.c.0.s8 %v1852
        %v1854 = vlaneseq
        %v1855 = vshrl.u32 %v1854, 7
        %v1856 = vsub.s32 %v1853, %v1855
        %v1857 = vrot.slane %v1850, %v1856
        %v1859 = vunpack.c.l.s4 1966171168
        %v1860 = vunpack.c.0.s8 %v1859
        %v1861 = vlaneseq
        %v1862 = vshrl.u32 %v1861, 7
        %v1863 = vsub.s32 %v1860, %v1862
        %v1864 = vrot.slane %v1857, %v1863
        %v1866 = vadd.f32 %v1706, %v1864
        %v1867 = vxor.u32 %v1866, 2147483648
        %v1868 = vmul.f32 %v1867, 1.442695
        %v1869 = vpow.pop %v1868
        %v1870 = vadd.f32 %v1869, 1.0
        %v1871 = vrcp.pop %v1870
        %v1872 = vmul.f32 1.0, %v1871
        %v1873 = vadd.f32 %v1845, %v613
        %v1874 = vmul.f32 %v1872, %v1873
        %v1876 = vrot.slane %v1706, 2
        %v1878 = vadd.f32 %v1876, %v1874
        %v1879 = vtanh.pop %v1878
        %v1880 = vsub.f32 %v1703, %v1879
        %v1882 = vrot.slane %v1872, 1
        %v1884 = vmul.f32 %v1882, %v1880
        %v1885 = vadd.f32 %v1879, %v1884
        %1886 = vst [vmem:[#allocation2 + $0x6] sm:$0x1] %v1885
        %s1887 = scalar_lea.vmem [#allocation3], 7
        %v1888 = vld [vmem:[%s1887] ss:$8 sm:$0x7]
        %1889 = vmatprep.subr.mxu0 %v566
        %1890 = vmatpush1.msra.mxu0 %v565
        %1891 = vmatprep.subr.mxu0 %v569
        %1892 = vmatpush1.msra.mxu0 %v568
        %1893 = vmatprep.subr.mxu0 %v572
        %1894 = vmatpush1.msra.mxu0 %v571
        %1895 = vmatprep.subr.mxu0 %v575
        %1896 = vmatpush1.msra.mxu0 %v574
        %1897 = vmatprep.subr.mxu0 %v578
        %1898 = vmatpush1.msra.mxu0 %v577
        %1899 = vmatprep.subr.mxu0 %v581
        %1900 = vmatpush1.msra.mxu0 %v580
        %1901 = vmatprep.subr.mxu0 %v584
        %1902 = vmatpush1.msra.mxu0 %v583
        %1903 = vmatprep.subr.mxu0 %v587
        %1904 = vmatpush1.msra.mxu0 %v586
        %1905 = vmatprep.subr.mxu0 %v590
        %1906 = vmatpush1.msra.mxu0 %v589
        %1907 = vmatprep.subr.mxu0 %v593
        %1908 = vmatpush1.msra.mxu0 %v592
        %1909 = vmatprep.subr.mxu0 %v596
        %1910 = vmatpush1.msra.mxu0 %v595
        %1911 = vmatprep.subr.mxu0 %v599
        %1912 = vmatpush1.msra.mxu0 %v598
        %1913 = vmatprep.subr.mxu0 %v602
        %1914 = vmatpush1.msra.mxu0 %v601
        %1915 = vmatprep.subr.mxu0 %v605
        %1916 = vmatpush1.msra.mxu0 %v604
        %1917 = vmatprep.subr.mxu0 %v608
        %1918 = vmatpush1.msra.mxu0 %v607
        %1919 = vmatprep.subr.mxu0 %v611
        %1920 = vmatpush1.msra.mxu0 %v610
        %1921 = vmatprep.subr.mxu0 0.0
        %1922 = vmatpush1.msra.mxu0 0.0
        %1923 = vmatprep.subr.mxu0 0.0
        %1924 = vmatpush1.msra.mxu0 0.0
        %1925 = vmatprep.subr.mxu0 0.0
        %1926 = vmatpush1.msra.mxu0 0.0
        %1927 = vmatprep.subr.mxu0 0.0
        %1928 = vmatpush1.msra.mxu0 0.0
        %1929 = vmatprep.subr.mxu0 0.0
        %1930 = vmatpush1.msra.mxu0 0.0
        %1931 = vmatprep.subr.mxu0 0.0
        %1932 = vmatpush1.msra.mxu0 0.0
        %1933 = vmatprep.subr.mxu0 0.0
        %1934 = vmatpush1.msra.mxu0 0.0
        %1935 = vmatprep.subr.mxu0 0.0
        %1936 = vmatpush1.msra.mxu0 0.0
        %1937 = vmatprep.subr.mxu0 0.0
        %1938 = vmatpush1.msra.mxu0 0.0
        %1939 = vmatprep.subr.mxu0 0.0
        %1940 = vmatpush1.msra.mxu0 0.0
        %1941 = vmatprep.subr.mxu0 0.0
        %1942 = vmatpush1.msra.mxu0 0.0
        %1943 = vmatprep.subr.mxu0 0.0
        %1944 = vmatpush1.msra.mxu0 0.0
        %1945 = vmatprep.subr.mxu0 0.0
        %1946 = vmatpush1.msra.mxu0 0.0
        %1947 = vmatprep.subr.mxu0 0.0
        %1948 = vmatpush1.msra.mxu0 0.0
        %1949 = vmatprep.subr.mxu0 0.0
        %1950 = vmatpush1.msra.mxu0 0.0
        %1951 = vmatprep.subr.mxu0 0.0
        %1952 = vmatpush1.msra.mxu0 0.0
        %1953 = vmatprep.mubr.f32.mxu0 0.0
        %1954 = vmatmul.mubr.f32.gmra.mrb[0].mxu0 %v1885
        %v1955 = vpop.f32.mrb[0].mxu0
        %v1956 = vadd.f32 0.0, %v1955
        %v1957 = vpop.f32.mrb[0].mxu0
        %v1958 = vadd.f32 0.0, %v1957
        %1959 = vdwg.mxu0
        %1960 = vmatprep.subr.mxu0 0.0
        %1961 = vmatpush1.msra.mxu0 %v567
        %1962 = vmatprep.subr.mxu0 0.0
        %1963 = vmatpush1.msra.mxu0 %v570
        %1964 = vmatprep.subr.mxu0 0.0
        %1965 = vmatpush1.msra.mxu0 %v573
        %1966 = vmatprep.subr.mxu0 0.0
        %1967 = vmatpush1.msra.mxu0 %v576
        %1968 = vmatprep.subr.mxu0 0.0
        %1969 = vmatpush1.msra.mxu0 %v579
        %1970 = vmatprep.subr.mxu0 0.0
        %1971 = vmatpush1.msra.mxu0 %v582
        %1972 = vmatprep.subr.mxu0 0.0
        %1973 = vmatpush1.msra.mxu0 %v585
        %1974 = vmatprep.subr.mxu0 0.0
        %1975 = vmatpush1.msra.mxu0 %v588
        %1976 = vmatprep.subr.mxu0 0.0
        %1977 = vmatpush1.msra.mxu0 %v591
        %1978 = vmatprep.subr.mxu0 0.0
        %1979 = vmatpush1.msra.mxu0 %v594
        %1980 = vmatprep.subr.mxu0 0.0
        %1981 = vmatpush1.msra.mxu0 %v597
        %1982 = vmatprep.subr.mxu0 0.0
        %1983 = vmatpush1.msra.mxu0 %v600
        %1984 = vmatprep.subr.mxu0 0.0
        %1985 = vmatpush1.msra.mxu0 %v603
        %1986 = vmatprep.subr.mxu0 0.0
        %1987 = vmatpush1.msra.mxu0 %v606
        %1988 = vmatprep.subr.mxu0 0.0
        %1989 = vmatpush1.msra.mxu0 %v609
        %1990 = vmatprep.subr.mxu0 0.0
        %1991 = vmatpush1.msra.mxu0 %v612
        %1992 = vmatprep.subr.mxu0 0.0
        %1993 = vmatpush1.msra.mxu0 0.0
        %1994 = vmatprep.subr.mxu0 0.0
        %1995 = vmatpush1.msra.mxu0 0.0
        %1996 = vmatprep.subr.mxu0 0.0
        %1997 = vmatpush1.msra.mxu0 0.0
        %1998 = vmatprep.subr.mxu0 0.0
        %1999 = vmatpush1.msra.mxu0 0.0
        %2000 = vmatprep.subr.mxu0 0.0
        %2001 = vmatpush1.msra.mxu0 0.0
        %2002 = vmatprep.subr.mxu0 0.0
        %2003 = vmatpush1.msra.mxu0 0.0
        %2004 = vmatprep.subr.mxu0 0.0
        %2005 = vmatpush1.msra.mxu0 0.0
        %2006 = vmatprep.subr.mxu0 0.0
        %2007 = vmatpush1.msra.mxu0 0.0
        %2008 = vmatprep.subr.mxu0 0.0
        %2009 = vmatpush1.msra.mxu0 0.0
        %2010 = vmatprep.subr.mxu0 0.0
        %2011 = vmatpush1.msra.mxu0 0.0
        %2012 = vmatprep.subr.mxu0 0.0
        %2013 = vmatpush1.msra.mxu0 0.0
        %2014 = vmatprep.subr.mxu0 0.0
        %2015 = vmatpush1.msra.mxu0 0.0
        %2016 = vmatprep.subr.mxu0 0.0
        %2017 = vmatpush1.msra.mxu0 0.0
        %2018 = vmatprep.subr.mxu0 0.0
        %2019 = vmatpush1.msra.mxu0 0.0
        %2020 = vmatprep.subr.mxu0 0.0
        %2021 = vmatpush1.msra.mxu0 0.0
        %2022 = vmatprep.subr.mxu0 0.0
        %2023 = vmatpush1.msra.mxu0 0.0
        %2024 = vmatprep.mubr.f32.mxu0 0.0
        %2025 = vmatmul.mubr.f32.gmra.mrb[0].mxu0 %v1885
        %v2026 = vpop.f32.mrb[0].mxu0
        %v2027 = vadd.f32 0.0, %v2026
        %v2028 = vpop.f32.mrb[0].mxu0
        %2029 = vdwg.mxu0
        %v2032 = vcombine.low %v1956, %v1958
        %v2034 = vunpack.c.l.s4 1966171168
        %v2035 = vunpack.c.0.s8 %v2034
        %v2036 = vlaneseq
        %v2037 = vshrl.u32 %v2036, 7
        %v2038 = vsub.s32 %v2035, %v2037
        %v2039 = vrot.slane %v2032, %v2038
        %v2041 = vunpack.c.l.s4 1966171168
        %v2042 = vunpack.c.0.s8 %v2041
        %v2043 = vlaneseq
        %v2044 = vshrl.u32 %v2043, 7
        %v2045 = vsub.s32 %v2042, %v2044
        %v2046 = vrot.slane %v2039, %v2045
        %v2048 = vadd.f32 %v1888, %v2046
        %v2049 = vxor.u32 %v2048, 2147483648
        %v2050 = vmul.f32 %v2049, 1.442695
        %v2051 = vpow.pop %v2050
        %v2052 = vadd.f32 %v2051, 1.0
        %v2053 = vrcp.pop %v2052
        %v2054 = vmul.f32 1.0, %v2053
        %v2055 = vadd.f32 %v2027, %v613
        %v2056 = vmul.f32 %v2054, %v2055
        %v2058 = vrot.slane %v1888, 2
        %v2060 = vadd.f32 %v2058, %v2056
        %v2061 = vtanh.pop %v2060
        %v2062 = vsub.f32 %v1885, %v2061
        %v2064 = vrot.slane %v2054, 1
        %v2066 = vmul.f32 %v2064, %v2062
        %v2067 = vadd.f32 %v2061, %v2066
        %2068 = vst [vmem:[#allocation2 + $0x7] sm:$0x1] %v2067
        %s2069 = scalar_lea.vmem [#allocation12], %s26
        %2070 = vst [vmem:[%s2069] sm:$0x1] %v2067
        // Predicated region
        $region57: #{tpu_custom_call.1} parent=39 // pred_check
          %p2071 = pneg %p164
        $region58: #{tpu_custom_call.1} parent=39 // pred_check_branch
          %2073 = sbr.rel (%p2071) target = $region60
        $region59: #{tpu_custom_call.1} parent=39 // pred_region
          %s2075 = ssub.s32 32, 32
          %2076 = vsyncadd [#allocation8], %s2075
          %s2078 = sshll.u32 [#allocation12], 4
          %s2079 = int_to_ptr.vmem [resolvable:$true] %s2078
          %2081 = dma.vmem_to_hbm [thread:$0]  %s2079, 32, %s6, [#allocation8]
        $region60: #{tpu_custom_call.1} parent=39 // pred_fallthru
          _
        // Predicated region
        $region61: #{tpu_custom_call.1} parent=39 // pred_check
          %p2082 = pneg %p164
        $region62: #{tpu_custom_call.1} parent=39 // pred_check_branch
          %2084 = sbr.rel (%p2082) target = $region64
        $region63: #{tpu_custom_call.1} parent=39 // pred_region
          %2085 = dma.done [#allocation8], 32
        $region64: #{tpu_custom_call.1} parent=39 // pred_fallthru
          _
      $region40: #{tpu_custom_call.1} parent=5 // pred_fallthru
        _
      %p2086 = scmp.le.s32.totalorder 2, %s21
      // Predicated region
      $region65: #{tpu_custom_call.1} parent=5 // pred_check
        %p2087 = pneg %p2086
      $region66: #{tpu_custom_call.1} parent=5 // pred_check_branch
        %2089 = sbr.rel (%p2087) target = $region68
      $region67: #{tpu_custom_call.1} parent=5 // pred_region
        %s2090 = ssub.s32 %s21, 2
      $region68: #{tpu_custom_call.1} parent=5 // pred_fallthru
        _
    $region6: #{tpu_custom_call.1} parent=1 // loop_footer
      %s25 = sadd.s32 1, %s21
    $region7: #{tpu_custom_call.1} parent=1 // loop_footer_branch
      %20 = sbr.rel target = $region3
    $region8: #{tpu_custom_call.1} parent=1 // loop_exit
      _
    %2091 = vsyncpa [#allocation7], 1
    %s2092 = scalar_lea.sflag [#allocation7], 1
    %2093 = vsyncpa %s2092, 1
    %2094 = vsyncpa [#allocation10], 1
    %s2095 = scalar_lea.sflag [#allocation10], 1
    %2096 = vsyncpa %s2095, 1
    %2097 = vsyncpa [#allocation8], 1
    %s2098 = scalar_lea.sflag [#allocation8], 1
    %2099 = vsyncpa %s2098, 1

</llo_original>
